<compile_context>
chip_gen: v5e
topology: v5e:2x2
jax: 0.10.0
libtpu: 0.0.40
codegen_flags: <defaults>
</compile_context>

<pallas_src>
import math
import functools

import jax
import jax.numpy as jnp
import numpy as np
from jax.experimental import pallas as pl
from jax.experimental.pallas import tpu as pltpu

LANE = 128  # lane-dense alignment for the fused Cout (use 256 on v6e/v7x if desired)


def _round_up(x, m):
    return (x + m - 1) // m * m


# ----------------------------------------------------------------------------
# Pallas kernel: fused 3x3 conv (all four heads), stride 1, 'same' padding.
# Padding is handled in-kernel (zero rows/cols built in VMEM); the input read
# from HBM is the raw (unpadded) bf16 feature map.
# ----------------------------------------------------------------------------
def _fused_heads_conv3x3_kernel(x_ref, w_ref, b_ref, o_ref):
    # x_ref: (1, H, W, Cin)      bf16 feature tile (one batch element)
    # w_ref: (3, 3*Cin, Cpad)    bf16 fused weights, index (dy, dx*Cin + c, cout)
    # b_ref: (1, Cpad)           f32 fused bias
    # o_ref: (1, H*W, Cpad)      f32 output, lane-dense last dim (single vst slab)
    _, H, W, Cin = x_ref.shape
    Cpad = o_ref.shape[-1]

    xb = x_ref[0]                                              # (H, W, Cin)

    # W-only im2col with in-kernel zero padding along W:
    #   xrow[h, j, dx*Cin + c] == padded_input[h+1, j+dx, c]
    zc = jnp.zeros((H, 1, Cin), xb.dtype)
    left = jnp.concatenate([zc, xb[:, : W - 1, :]], axis=1)    # dx = 0
    right = jnp.concatenate([xb[:, 1:, :], zc], axis=1)        # dx = 2
    xrow = jnp.concatenate([left, xb, right], axis=-1)         # (H, W, 3*Cin)

    # Zero rows top/bottom -> padded rows (cheap concat along the outer dim).
    zr = jnp.zeros((1, W, 3 * Cin), xb.dtype)
    xw = jnp.concatenate([zr, xrow, zr], axis=0)               # (H+2, W, 3*Cin)

    # 3 MXU matmuls with K = 3*Cin (bf16 inputs, f32 accumulation).
    acc = jnp.zeros((H * W, Cpad), jnp.float32)
    for dy in range(3):
        patch = xw[dy:dy + H].reshape(H * W, 3 * Cin)
        acc = acc + jnp.dot(patch, w_ref[dy],
                            preferred_element_type=jnp.float32)
    acc = acc + b_ref[...]                                     # (1, Cpad) broadcast

    # Single unmasked, lane-dense store.
    o_ref[0] = acc.astype(o_ref.dtype)


def fused_conv3x3(feat_bf16, w_fused, b_fused, *, out_dtype=jnp.float32):
    """feat_bf16: (B,H,W,Cin) bf16; w_fused: (3,3*Cin,Cpad) bf16;
    b_fused: (1,Cpad) f32  ->  (B, H*W, Cpad) out_dtype."""
    B, H, W, Cin = feat_bf16.shape
    Cpad = w_fused.shape[-1]

    flops = 2 * B * H * W * (9 * Cin) * Cpad
    bytes_accessed = (feat_bf16.size * feat_bf16.dtype.itemsize
                      + w_fused.size * w_fused.dtype.itemsize
                      + b_fused.size * 4
                      + B * H * W * Cpad * jnp.dtype(out_dtype).itemsize)

    return pl.pallas_call(
        _fused_heads_conv3x3_kernel,
        out_shape=jax.ShapeDtypeStruct((B, H * W, Cpad), out_dtype),
        grid=(B,),
        in_specs=[
            pl.BlockSpec((1, H, W, Cin), lambda b: (b, 0, 0, 0)),
            pl.BlockSpec((3, 3 * Cin, Cpad), lambda b: (0, 0, 0)),
            pl.BlockSpec((1, Cpad), lambda b: (0, 0)),
        ],
        out_specs=pl.BlockSpec((1, H * W, Cpad), lambda b: (b, 0, 0)),
        compiler_params=pltpu.CompilerParams(
            dimension_semantics=("parallel",),
            vmem_limit_bytes=32 * 1024 * 1024),
        cost_estimate=pl.CostEstimate(flops=flops, transcendentals=0,
                                      bytes_accessed=bytes_accessed),
    )(feat_bf16, w_fused, b_fused)


# ----------------------------------------------------------------------------
# Parameter init (matches PredictionHead._init_weights: xavier_uniform weight,
# zero bias).  Weights stored HWIO: (3, 3, Cin, Cout).
# ----------------------------------------------------------------------------
def init_head(key, in_channels, out_channels, dtype=jnp.float32):
    fan_in = in_channels * 9
    fan_out = out_channels * 9
    bound = math.sqrt(6.0 / (fan_in + fan_out))
    w = jax.random.uniform(key, (3, 3, in_channels, out_channels),
                           dtype=dtype, minval=-bound, maxval=bound)
    b = jnp.zeros((out_channels,), dtype=dtype)
    return {"w": w, "b": b}


def init_combined_ssd(key, num_classes, num_landmarks,
                      backbone_channels, num_anchors_list):
    params = {"cls": [], "box": [], "lmk": [], "gaze": []}
    for i, in_c in enumerate(backbone_channels):
        na = num_anchors_list[i]
        key, k1, k2, k3, k4 = jax.random.split(key, 5)
        params["cls"].append(init_head(k1, in_c, na * (num_classes + 1)))
        params["box"].append(init_head(k2, in_c, na * 4))
        params["lmk"].append(init_head(k3, in_c, na * num_landmarks * 2))
        params["gaze"].append(init_head(k4, in_c, na * 2))
    return params


def fuse_level_params(params, level, *, lane_multiple=LANE,
                      compute_dtype=jnp.bfloat16):
    """Concatenate cls|box|lmk|gaze weights along Cout, pad Cout to a lane-dense
    multiple, reshape to (3, 3*Cin, Cpad) and cast to bf16."""
    ws = [params[h][level]["w"] for h in ("cls", "box", "lmk", "gaze")]
    bs = [params[h][level]["b"] for h in ("cls", "box", "lmk", "gaze")]
    head_sizes = tuple(int(w.shape[-1]) for w in ws)           # (Ccls,Cbox,Clmk,Cgaze)
    cin = int(ws[0].shape[2])
    w_cat = jnp.concatenate(ws, axis=-1)                       # (3,3,Cin,Ctot)
    b_cat = jnp.concatenate(bs, axis=0)                        # (Ctot,)
    ctot = int(w_cat.shape[-1])
    cpad = _round_up(ctot, lane_multiple)
    w_cat = jnp.pad(w_cat, ((0, 0), (0, 0), (0, 0), (0, cpad - ctot)))
    b_cat = jnp.pad(b_cat, ((0, cpad - ctot),))
    w_fused = w_cat.reshape(3, 3 * cin, cpad).astype(compute_dtype)
    b_fused = b_cat.reshape(1, cpad).astype(jnp.float32)
    return {"w": w_fused, "b": b_fused}, head_sizes


# ----------------------------------------------------------------------------
# Backbone stub (ResNetSSDBackbone not provided): avg-pool + 1x1 projection.
# ----------------------------------------------------------------------------
def make_stub_backbone(key, in_channels, backbone_channels, strides,
                       dtype=jnp.float32):
    projs = []
    for c in backbone_channels:
        key, k = jax.random.split(key)
        projs.append(jax.random.normal(k, (in_channels, c), dtype=dtype) * 0.1)

    def backbone(x_nchw):
        x_nhwc = jnp.transpose(x_nchw, (0, 2, 3, 1))           # -> NHWC
        feats = []
        for s, proj in zip(strides, projs):
            B, H, W, C = x_nhwc.shape
            pooled = x_nhwc.reshape(B, H // s, s, W // s, s, C).mean(axis=(2, 4))
            feats.append(jnp.einsum("bhwc,cd->bhwd", pooled, proj))
        return feats                                           # list of NHWC maps

    return backbone


# ----------------------------------------------------------------------------
# Forward pass (mirrors CombinedSSD.forward).  One fused Pallas conv per level;
# channel slices in the order [cls | box | lmk | gaze], then the same
# permute/view/cat epilogue as the PyTorch module (NHWC layout already matches
# permute(0,2,3,1)).
# ----------------------------------------------------------------------------
def combined_ssd_forward(fused_params, x_nchw, *, backbone,
                         head_sizes_per_level, num_classes, num_landmarks):
    feats = backbone(x_nchw)
    B = x_nchw.shape[0]
    cls_outs, box_outs, lmk_outs, gaze_outs = [], [], [], []
    for fp, sizes, feat in zip(fused_params, head_sizes_per_level, feats):
        # bf16 cast fuses into the backbone epilogue under jit (no extra pass).
        y = fused_conv3x3(feat.astype(jnp.bfloat16), fp["w"], fp["b"])
        c_cls, c_box, c_lmk, c_gaze = sizes
        o1 = c_cls
        o2 = o1 + c_box
        o3 = o2 + c_lmk
        o4 = o3 + c_gaze
        cls_outs.append(y[:, :, 0:o1].reshape(B, -1, num_classes + 1))
        box_outs.append(y[:, :, o1:o2].reshape(B, -1, 4))
        lmk_outs.append(y[:, :, o2:o3].reshape(B, -1, num_landmarks * 2))
        gaze_outs.append(y[:, :, o3:o4].reshape(B, -1, 2))
    return (jnp.concatenate(cls_outs, axis=1),
            jnp.concatenate(box_outs, axis=1),
            jnp.concatenate(lmk_outs, axis=1),
            jnp.concatenate(gaze_outs, axis=1))


# ----------------------------------------------------------------------------
# Reference conv (lax) for the correctness check (same bf16 inputs, f32 acc).
# ----------------------------------------------------------------------------
def conv3x3_ref(x_nhwc, weight, bias):
    out = jax.lax.conv_general_dilated(
        x_nhwc, weight, window_strides=(1, 1), padding="SAME",
        dimension_numbers=("NHWC", "HWIO", "NHWC"),
        preferred_element_type=jnp.float32)
    return out + bias[None, None, None, :].astype(jnp.float32)


if __name__ == "__main__":
    # Small config consistent with the module's __init__
    num_classes = 2
    num_landmarks = 5
    backbone_channels = [32, 64]
    num_anchors_list = [2, 3]
    strides = [4, 8]          # 8x8 and 4x4 feature maps from a 32x32 input

    key = jax.random.PRNGKey(0)
    k_params, k_backbone, k_x = jax.random.split(key, 3)

    params = init_combined_ssd(k_params, num_classes, num_landmarks,
                               backbone_channels, num_anchors_list)
    backbone = make_stub_backbone(k_backbone, in_channels=3,
                                  backbone_channels=backbone_channels,
                                  strides=strides)

    # Fuse the four heads per level once (weights concatenated along Cout,
    # padded to lane-dense Cout, cast to bf16).
    fused_params, head_sizes_per_level = [], []
    for lvl in range(len(backbone_channels)):
        fp, sizes = fuse_level_params(params, lvl)
        fused_params.append(fp)
        head_sizes_per_level.append(sizes)

    # PyTorch-style NCHW image input.
    x = jax.random.normal(k_x, (2, 3, 32, 32), dtype=jnp.float32)

    fwd = jax.jit(functools.partial(
        combined_ssd_forward, backbone=backbone,
        head_sizes_per_level=head_sizes_per_level,
        num_classes=num_classes, num_landmarks=num_landmarks))
    cls_out, box_out, lmk_out, gaze_out = jax.block_until_ready(
        fwd(fused_params, x))

    # Shape check: total anchors = 8*8*2 + 4*4*3 = 176
    n_anchors = sum((32 // s) * (32 // s) * a
                    for s, a in zip(strides, num_anchors_list))
    assert cls_out.shape == (2, n_anchors, num_classes + 1)
    assert box_out.shape == (2, n_anchors, 4)
    assert lmk_out.shape == (2, n_anchors, num_landmarks * 2)
    assert gaze_out.shape == (2, n_anchors, 2)

    # Numerics + head-slice-order check: for every level and every head,
    # compare the fused Pallas conv's channel slice against an unfused
    # lax.conv reference on the same bf16 inputs with f32 accumulation.
    feats = backbone(x)
    for lvl, (fp, sizes) in enumerate(zip(fused_params, head_sizes_per_level)):
        feat_b = feats[lvl].astype(jnp.bfloat16)
        B, H, W, _ = feat_b.shape
        y = jax.block_until_ready(fused_conv3x3(feat_b, fp["w"], fp["b"]))
        offs = np.cumsum((0,) + sizes)
        for hi, name in enumerate(("cls", "box", "lmk", "gaze")):
            lo, hiu = int(offs[hi]), int(offs[hi + 1])
            ours = np.asarray(y[:, :, lo:hiu]).reshape(B, H, W, hiu - lo)
            ref = conv3x3_ref(feat_b,
                              params[name][lvl]["w"].astype(jnp.bfloat16),
                              params[name][lvl]["b"])
            np.testing.assert_allclose(ours, np.asarray(ref),
                                       rtol=1e-4, atol=1e-4)

    print("KERNEL_OK")
</pallas_src>

<mosaic_0001>
module attributes {stable_mosaic.version = 11 : i64} {
  func.func @_fused_heads_conv3x3_kernel(%arg0: i32, %arg1: memref<1x8x8x32xbf16, #tpu.memory_space<vmem>>, %arg2: memref<3x96x128xbf16, #tpu.memory_space<vmem>>, %arg3: memref<1x128xf32, #tpu.memory_space<vmem>>, %arg4: memref<1x64x128xf32, #tpu.memory_space<vmem>>) attributes {dimension_semantics = [#tpu.dimension_semantics<parallel>], iteration_bounds = array<i64: 2>, scalar_prefetch = 0 : i64, scratch_operands = 0 : i64, tpu.core_type = #tpu.core_type<tc>, window_params = [{transform_indices = @transform_0, window_bounds = array<i64: 1, 8, 8, 32>}, {pipeline_mode = #tpu.pipeline_mode<synchronous>, transform_indices = @transform_1, window_bounds = array<i64: 3, 96, 128>}, {pipeline_mode = #tpu.pipeline_mode<synchronous>, transform_indices = @transform_2, window_bounds = array<i64: 1, 128>}, {transform_indices = @transform_3, window_bounds = array<i64: 1, 64, 128>}]} {
    %c0 = arith.constant 0 : index
    %c0_0 = arith.constant 0 : index
    %c0_1 = arith.constant 0 : index
    %c0_2 = arith.constant 0 : index
    %0 = vector.load %arg1[%c0, %c0_0, %c0_1, %c0_2] : memref<1x8x8x32xbf16, #tpu.memory_space<vmem>>, vector<1x8x8x32xbf16>
    %1 = vector.shape_cast %0 : vector<1x8x8x32xbf16> to vector<8x8x32xbf16>
    %cst = arith.constant 0.000000e+00 : bf16
    %2 = vector.broadcast %cst : bf16 to vector<8x1x32xbf16>
    %3 = vector.extract_strided_slice %1 {offsets = [0, 0, 0], sizes = [8, 7, 32], strides = [1, 1, 1]} : vector<8x8x32xbf16> to vector<8x7x32xbf16>
    %4 = tpu.concatenate %2, %3 in 1 : vector<8x1x32xbf16>, vector<8x7x32xbf16> -> vector<8x8x32xbf16>
    %5 = vector.extract_strided_slice %1 {offsets = [0, 1, 0], sizes = [8, 7, 32], strides = [1, 1, 1]} : vector<8x8x32xbf16> to vector<8x7x32xbf16>
    %6 = tpu.concatenate %5, %2 in 1 : vector<8x7x32xbf16>, vector<8x1x32xbf16> -> vector<8x8x32xbf16>
    %7 = tpu.concatenate %4, %1, %6 in 2 : vector<8x8x32xbf16>, vector<8x8x32xbf16>, vector<8x8x32xbf16> -> vector<8x8x96xbf16>
    %cst_3 = arith.constant 0.000000e+00 : bf16
    %8 = vector.broadcast %cst_3 : bf16 to vector<1x8x96xbf16>
    %9 = tpu.concatenate %8, %7, %8 in 0 : vector<1x8x96xbf16>, vector<8x8x96xbf16>, vector<1x8x96xbf16> -> vector<10x8x96xbf16>
    %cst_4 = arith.constant 0.000000e+00 : f32
    %10 = vector.broadcast %cst_4 : f32 to vector<64x128xf32>
    %11 = vector.extract_strided_slice %9 {offsets = [0, 0, 0], sizes = [8, 8, 96], strides = [1, 1, 1]} : vector<10x8x96xbf16> to vector<8x8x96xbf16>
    %12 = vector.shape_cast %11 : vector<8x8x96xbf16> to vector<64x96xbf16>
    %c0_5 = arith.constant 0 : index
    %c0_6 = arith.constant 0 : index
    %c0_7 = arith.constant 0 : index
    %13 = vector.load %arg2[%c0_5, %c0_6, %c0_7] : memref<3x96x128xbf16, #tpu.memory_space<vmem>>, vector<1x96x128xbf16>
    %14 = vector.shape_cast %13 : vector<1x96x128xbf16> to vector<96x128xbf16>
    %cst_8 = arith.constant dense<0.000000e+00> : vector<64x128xf32>
    %15 = tpu.matmul %12, %14, %cst_8 {dimension_numbers = #tpu.dot_dimension_numbers<[1], [0], [0], [1], [0, 0, 1, 1], [], []>} : vector<64x96xbf16>, vector<96x128xbf16>, vector<64x128xf32> -> vector<64x128xf32>
    %16 = arith.addf %10, %15 : vector<64x128xf32>
    %17 = vector.extract_strided_slice %9 {offsets = [1, 0, 0], sizes = [8, 8, 96], strides = [1, 1, 1]} : vector<10x8x96xbf16> to vector<8x8x96xbf16>
    %18 = vector.shape_cast %17 : vector<8x8x96xbf16> to vector<64x96xbf16>
    %c1 = arith.constant 1 : index
    %c0_9 = arith.constant 0 : index
    %c0_10 = arith.constant 0 : index
    %19 = vector.load %arg2[%c1, %c0_9, %c0_10] : memref<3x96x128xbf16, #tpu.memory_space<vmem>>, vector<1x96x128xbf16>
    %20 = vector.shape_cast %19 : vector<1x96x128xbf16> to vector<96x128xbf16>
    %cst_11 = arith.constant dense<0.000000e+00> : vector<64x128xf32>
    %21 = tpu.matmul %18, %20, %cst_11 {dimension_numbers = #tpu.dot_dimension_numbers<[1], [0], [0], [1], [0, 0, 1, 1], [], []>} : vector<64x96xbf16>, vector<96x128xbf16>, vector<64x128xf32> -> vector<64x128xf32>
    %22 = arith.addf %16, %21 : vector<64x128xf32>
    %23 = vector.extract_strided_slice %9 {offsets = [2, 0, 0], sizes = [8, 8, 96], strides = [1, 1, 1]} : vector<10x8x96xbf16> to vector<8x8x96xbf16>
    %24 = vector.shape_cast %23 : vector<8x8x96xbf16> to vector<64x96xbf16>
    %c2 = arith.constant 2 : index
    %c0_12 = arith.constant 0 : index
    %c0_13 = arith.constant 0 : index
    %25 = vector.load %arg2[%c2, %c0_12, %c0_13] : memref<3x96x128xbf16, #tpu.memory_space<vmem>>, vector<1x96x128xbf16>
    %26 = vector.shape_cast %25 : vector<1x96x128xbf16> to vector<96x128xbf16>
    %cst_14 = arith.constant dense<0.000000e+00> : vector<64x128xf32>
    %27 = tpu.matmul %24, %26, %cst_14 {dimension_numbers = #tpu.dot_dimension_numbers<[1], [0], [0], [1], [0, 0, 1, 1], [], []>} : vector<64x96xbf16>, vector<96x128xbf16>, vector<64x128xf32> -> vector<64x128xf32>
    %28 = arith.addf %22, %27 : vector<64x128xf32>
    %c0_15 = arith.constant 0 : index
    %c0_16 = arith.constant 0 : index
    %29 = vector.load %arg3[%c0_15, %c0_16] : memref<1x128xf32, #tpu.memory_space<vmem>>, vector<1x128xf32>
    %30 = vector.broadcast %29 : vector<1x128xf32> to vector<64x128xf32>
    %31 = arith.addf %28, %30 : vector<64x128xf32>
    %c0_17 = arith.constant 0 : index
    %c0_18 = arith.constant 0 : index
    %c0_19 = arith.constant 0 : index
    %32 = vector.load %arg4[%c0_17, %c0_18, %c0_19] : memref<1x64x128xf32, #tpu.memory_space<vmem>>, vector<1x64x128xf32>
    %33 = vector.shape_cast %32 : vector<1x64x128xf32> to vector<64x128xf32>
    %34 = vector.shape_cast %31 : vector<64x128xf32> to vector<1x64x128xf32>
    tpu.vector_store %arg4[%c0_17, %c0_18, %c0_19], %34 {strides = array<i32>} : memref<1x64x128xf32, #tpu.memory_space<vmem>>, vector<1x64x128xf32>,
    return
  }
  func.func @transform_0(%arg0: i32) -> (i32, i32, i32, i32) {
    %c0_i32 = arith.constant 0 : i32
    %c0_i32_0 = arith.constant 0 : i32
    %c0_i32_1 = arith.constant 0 : i32
    %c0_i32_2 = arith.constant 0 : i32
    return %arg0, %c0_i32, %c0_i32_0, %c0_i32_1 : i32, i32, i32, i32
  }
  func.func @transform_1(%arg0: i32) -> (i32, i32, i32) {
    %c0_i32 = arith.constant 0 : i32
    %c0_i32_0 = arith.constant 0 : i32
    %c0_i32_1 = arith.constant 0 : i32
    %c0_i32_2 = arith.constant 0 : i32
    return %c0_i32, %c0_i32_0, %c0_i32_1 : i32, i32, i32
  }
  func.func @transform_2(%arg0: i32) -> (i32, i32) {
    %c0_i32 = arith.constant 0 : i32
    %c0_i32_0 = arith.constant 0 : i32
    %c0_i32_1 = arith.constant 0 : i32
    return %c0_i32, %c0_i32_0 : i32, i32
  }
  func.func @transform_3(%arg0: i32) -> (i32, i32, i32) {
    %c0_i32 = arith.constant 0 : i32
    %c0_i32_0 = arith.constant 0 : i32
    %c0_i32_1 = arith.constant 0 : i32
    return %arg0, %c0_i32, %c0_i32_0 : i32, i32, i32
  }
}

module attributes {stable_mosaic.version = 11 : i64} {
  func.func @_fused_heads_conv3x3_kernel(%arg0: i32, %arg1: memref<1x4x4x64xbf16, #tpu.memory_space<vmem>>, %arg2: memref<3x192x128xbf16, #tpu.memory_space<vmem>>, %arg3: memref<1x128xf32, #tpu.memory_space<vmem>>, %arg4: memref<1x16x128xf32, #tpu.memory_space<vmem>>) attributes {dimension_semantics = [#tpu.dimension_semantics<parallel>], iteration_bounds = array<i64: 2>, scalar_prefetch = 0 : i64, scratch_operands = 0 : i64, tpu.core_type = #tpu.core_type<tc>, window_params = [{transform_indices = @transform_0, window_bounds = array<i64: 1, 4, 4, 64>}, {pipeline_mode = #tpu.pipeline_mode<synchronous>, transform_indices = @transform_1, window_bounds = array<i64: 3, 192, 128>}, {pipeline_mode = #tpu.pipeline_mode<synchronous>, transform_indices = @transform_2, window_bounds = array<i64: 1, 128>}, {transform_indices = @transform_3, window_bounds = array<i64: 1, 16, 128>}]} {
    %c0 = arith.constant 0 : index
    %c0_0 = arith.constant 0 : index
    %c0_1 = arith.constant 0 : index
    %c0_2 = arith.constant 0 : index
    %0 = vector.load %arg1[%c0, %c0_0, %c0_1, %c0_2] : memref<1x4x4x64xbf16, #tpu.memory_space<vmem>>, vector<1x4x4x64xbf16>
    %1 = vector.shape_cast %0 : vector<1x4x4x64xbf16> to vector<4x4x64xbf16>
    %cst = arith.constant 0.000000e+00 : bf16
    %2 = vector.broadcast %cst : bf16 to vector<4x1x64xbf16>
    %3 = vector.extract_strided_slice %1 {offsets = [0, 0, 0], sizes = [4, 3, 64], strides = [1, 1, 1]} : vector<4x4x64xbf16> to vector<4x3x64xbf16>
    %4 = tpu.concatenate %2, %3 in 1 : vector<4x1x64xbf16>, vector<4x3x64xbf16> -> vector<4x4x64xbf16>
    %5 = vector.extract_strided_slice %1 {offsets = [0, 1, 0], sizes = [4, 3, 64], strides = [1, 1, 1]} : vector<4x4x64xbf16> to vector<4x3x64xbf16>
    %6 = tpu.concatenate %5, %2 in 1 : vector<4x3x64xbf16>, vector<4x1x64xbf16> -> vector<4x4x64xbf16>
    %7 = tpu.concatenate %4, %1, %6 in 2 : vector<4x4x64xbf16>, vector<4x4x64xbf16>, vector<4x4x64xbf16> -> vector<4x4x192xbf16>
    %cst_3 = arith.constant 0.000000e+00 : bf16
    %8 = vector.broadcast %cst_3 : bf16 to vector<1x4x192xbf16>
    %9 = tpu.concatenate %8, %7, %8 in 0 : vector<1x4x192xbf16>, vector<4x4x192xbf16>, vector<1x4x192xbf16> -> vector<6x4x192xbf16>
    %cst_4 = arith.constant 0.000000e+00 : f32
    %10 = vector.broadcast %cst_4 : f32 to vector<16x128xf32>
    %11 = vector.extract_strided_slice %9 {offsets = [0, 0, 0], sizes = [4, 4, 192], strides = [1, 1, 1]} : vector<6x4x192xbf16> to vector<4x4x192xbf16>
    %12 = vector.shape_cast %11 : vector<4x4x192xbf16> to vector<16x192xbf16>
    %c0_5 = arith.constant 0 : index
    %c0_6 = arith.constant 0 : index
    %c0_7 = arith.constant 0 : index
    %13 = vector.load %arg2[%c0_5, %c0_6, %c0_7] : memref<3x192x128xbf16, #tpu.memory_space<vmem>>, vector<1x192x128xbf16>
    %14 = vector.shape_cast %13 : vector<1x192x128xbf16> to vector<192x128xbf16>
    %cst_8 = arith.constant dense<0.000000e+00> : vector<16x128xf32>
    %15 = tpu.matmul %12, %14, %cst_8 {dimension_numbers = #tpu.dot_dimension_numbers<[1], [0], [0], [1], [0, 0, 1, 1], [], []>} : vector<16x192xbf16>, vector<192x128xbf16>, vector<16x128xf32> -> vector<16x128xf32>
    %16 = arith.addf %10, %15 : vector<16x128xf32>
    %17 = vector.extract_strided_slice %9 {offsets = [1, 0, 0], sizes = [4, 4, 192], strides = [1, 1, 1]} : vector<6x4x192xbf16> to vector<4x4x192xbf16>
    %18 = vector.shape_cast %17 : vector<4x4x192xbf16> to vector<16x192xbf16>
    %c1 = arith.constant 1 : index
    %c0_9 = arith.constant 0 : index
    %c0_10 = arith.constant 0 : index
    %19 = vector.load %arg2[%c1, %c0_9, %c0_10] : memref<3x192x128xbf16, #tpu.memory_space<vmem>>, vector<1x192x128xbf16>
    %20 = vector.shape_cast %19 : vector<1x192x128xbf16> to vector<192x128xbf16>
    %cst_11 = arith.constant dense<0.000000e+00> : vector<16x128xf32>
    %21 = tpu.matmul %18, %20, %cst_11 {dimension_numbers = #tpu.dot_dimension_numbers<[1], [0], [0], [1], [0, 0, 1, 1], [], []>} : vector<16x192xbf16>, vector<192x128xbf16>, vector<16x128xf32> -> vector<16x128xf32>
    %22 = arith.addf %16, %21 : vector<16x128xf32>
    %23 = vector.extract_strided_slice %9 {offsets = [2, 0, 0], sizes = [4, 4, 192], strides = [1, 1, 1]} : vector<6x4x192xbf16> to vector<4x4x192xbf16>
    %24 = vector.shape_cast %23 : vector<4x4x192xbf16> to vector<16x192xbf16>
    %c2 = arith.constant 2 : index
    %c0_12 = arith.constant 0 : index
    %c0_13 = arith.constant 0 : index
    %25 = vector.load %arg2[%c2, %c0_12, %c0_13] : memref<3x192x128xbf16, #tpu.memory_space<vmem>>, vector<1x192x128xbf16>
    %26 = vector.shape_cast %25 : vector<1x192x128xbf16> to vector<192x128xbf16>
    %cst_14 = arith.constant dense<0.000000e+00> : vector<16x128xf32>
    %27 = tpu.matmul %24, %26, %cst_14 {dimension_numbers = #tpu.dot_dimension_numbers<[1], [0], [0], [1], [0, 0, 1, 1], [], []>} : vector<16x192xbf16>, vector<192x128xbf16>, vector<16x128xf32> -> vector<16x128xf32>
    %28 = arith.addf %22, %27 : vector<16x128xf32>
    %c0_15 = arith.constant 0 : index
    %c0_16 = arith.constant 0 : index
    %29 = vector.load %arg3[%c0_15, %c0_16] : memref<1x128xf32, #tpu.memory_space<vmem>>, vector<1x128xf32>
    %30 = vector.broadcast %29 : vector<1x128xf32> to vector<16x128xf32>
    %31 = arith.addf %28, %30 : vector<16x128xf32>
    %c0_17 = arith.constant 0 : index
    %c0_18 = arith.constant 0 : index
    %c0_19 = arith.constant 0 : index
    %32 = vector.load %arg4[%c0_17, %c0_18, %c0_19] : memref<1x16x128xf32, #tpu.memory_space<vmem>>, vector<1x16x128xf32>
    %33 = vector.shape_cast %32 : vector<1x16x128xf32> to vector<16x128xf32>
    %34 = vector.shape_cast %31 : vector<16x128xf32> to vector<1x16x128xf32>
    tpu.vector_store %arg4[%c0_17, %c0_18, %c0_19], %34 {strides = array<i32>} : memref<1x16x128xf32, #tpu.memory_space<vmem>>, vector<1x16x128xf32>,
    return
  }
  func.func @transform_0(%arg0: i32) -> (i32, i32, i32, i32) {
    %c0_i32 = arith.constant 0 : i32
    %c0_i32_0 = arith.constant 0 : i32
    %c0_i32_1 = arith.constant 0 : i32
    %c0_i32_2 = arith.constant 0 : i32
    return %arg0, %c0_i32, %c0_i32_0, %c0_i32_1 : i32, i32, i32, i32
  }
  func.func @transform_1(%arg0: i32) -> (i32, i32, i32) {
    %c0_i32 = arith.constant 0 : i32
    %c0_i32_0 = arith.constant 0 : i32
    %c0_i32_1 = arith.constant 0 : i32
    %c0_i32_2 = arith.constant 0 : i32
    return %c0_i32, %c0_i32_0, %c0_i32_1 : i32, i32, i32
  }
  func.func @transform_2(%arg0: i32) -> (i32, i32) {
    %c0_i32 = arith.constant 0 : i32
    %c0_i32_0 = arith.constant 0 : i32
    %c0_i32_1 = arith.constant 0 : i32
    return %c0_i32, %c0_i32_0 : i32, i32
  }
  func.func @transform_3(%arg0: i32) -> (i32, i32, i32) {
    %c0_i32 = arith.constant 0 : i32
    %c0_i32_0 = arith.constant 0 : i32
    %c0_i32_1 = arith.constant 0 : i32
    return %arg0, %c0_i32, %c0_i32_0 : i32, i32, i32
  }
}

</mosaic_0001>

<llo_original>
// kernel: combined_ssd_forward.2
$region0: #{combined_ssd_forward.2}
  #allocation0 [shape = 'u32[]', space=smem, size = 0x4, offset = 0x4, fixed_abs, tag = 'smem constant byte address 0x4 - core index']
  #allocation1 [shape = 'u32[72,128]{1,0:T(1,128)}', space=vmem, size = 0x9000, scoped, tag = 'internal scratch']
  %s0 = inlined_call_operand.vmem [shape: bf16[2,8,8,32], index: 0, kind: input, shape index: {}]
  %s1 = inlined_call_operand.vmem [shape: bf16[3,96,128], index: 1, kind: input, shape index: {}]
  %s2 = inlined_call_operand.vmem [shape: f32[1,128], index: 2, kind: input, shape index: {}]
  %s3 = inlined_call_operand.vmem [shape: f32[2,64,128], index: 3, kind: output, shape index: {}]
  %s4 = sld [smem:[#allocation0]]
  $region45: #{combined_ssd_forward.2} parent=0
    _
  %s6 = ssub.s32 1, %s4
  %s7 = scalar_select 0, %s6, %s4
  loop: start=0, step=1, limit=4
  $region2: #{combined_ssd_forward.2} parent=0 // loop_pre_header
    _
  $region3: #{combined_ssd_forward.2} parent=0 // loop_header
    %s9 = sphi 0, %s13
    %p10 = scmp.ge.s32.totalorder %s9, 4
    %s19 = sphi 0, %s21
    %s22 = sphi 0, %s19
    %s23 = sphi 0, %s22
    %s39 = sphi 0, %s23
    %s43 = sphi 0, %s43
    %s45 = sphi 0, %s43
    %s46 = sphi 0, %s45
    %s60 = sphi 0, %s46
    %s64 = sphi 0, %s64
    %s66 = sphi 0, %s64
    %s67 = sphi 0, %s66
    %s81 = sphi 0, %s67
    %s87 = sphi 0, %s89
    %s90 = sphi 0, %s87
    %s91 = sphi 0, %s90
    %s107 = sphi 0, %s91
  $region4: #{combined_ssd_forward.2} parent=0 // loop_header_branch
    %12 = sbr.rel (%p10) target = $region8
  $region5: #{combined_ssd_forward.2} parent=0 // loop_body
    %s14 = ssub.s32 %s9, 1
    %s15 = ssub.s32 %s9, 2
    %s16 = sadd.s32 %s9, 1
    %s17 = ssub.s32 %s9, %s16
    %p18 = scmp.eq.s32.totalorder %s17, 0
    %s20 = sadd.s32 %s19, 1
    %s21 = scalar_select %p18, %s19, %s20
    %p24 = pneg %p18
    %p25 = scmp.eq.s32.totalorder %s9, 1
    %p26 = por %p24, %p25
    %p27 = scmp.ne.s32.totalorder %s19, %s22
    %p28 = scmp.eq.s32.totalorder %s9, 0
    %p29 = por %p27, %p28
    %p30 = scmp.ne.s32.totalorder %s19, %s22
    %p31 = scmp.eq.s32.totalorder %s14, 1
    %p32 = por %p30, %p31
    %p33 = scmp.ne.s32.totalorder %s22, %s23
    %p34 = scmp.eq.s32.totalorder %s14, 0
    %p35 = por %p33, %p34
    %p36 = scmp.ne.s32.totalorder %s22, %s23
    %p37 = scmp.eq.s32.totalorder %s15, 1
    %p38 = por %p36, %p37
    %p40 = scmp.ne.s32.totalorder %s23, %s39
    %p41 = scmp.eq.s32.totalorder %s15, 0
    %p42 = por %p40, %p41
    %s44 = sadd.s32 %s43, 1
    %p47 = scmp.eq.s32.totalorder %s9, 1
    %p48 = scmp.ne.s32.totalorder %s43, %s45
    %p49 = scmp.eq.s32.totalorder %s9, 0
    %p50 = por %p48, %p49
    %p51 = scmp.ne.s32.totalorder %s43, %s45
    %p52 = scmp.eq.s32.totalorder %s14, 1
    %p53 = por %p51, %p52
    %p54 = scmp.ne.s32.totalorder %s45, %s46
    %p55 = scmp.eq.s32.totalorder %s14, 0
    %p56 = por %p54, %p55
    %p57 = scmp.ne.s32.totalorder %s45, %s46
    %p58 = scmp.eq.s32.totalorder %s15, 1
    %p59 = por %p57, %p58
    %p61 = scmp.ne.s32.totalorder %s46, %s60
    %p62 = scmp.eq.s32.totalorder %s15, 0
    %p63 = por %p61, %p62
    %s65 = sadd.s32 %s64, 1
    %p68 = scmp.eq.s32.totalorder %s9, 1
    %p69 = scmp.ne.s32.totalorder %s64, %s66
    %p70 = scmp.eq.s32.totalorder %s9, 0
    %p71 = por %p69, %p70
    %p72 = scmp.ne.s32.totalorder %s64, %s66
    %p73 = scmp.eq.s32.totalorder %s14, 1
    %p74 = por %p72, %p73
    %p75 = scmp.ne.s32.totalorder %s66, %s67
    %p76 = scmp.eq.s32.totalorder %s14, 0
    %p77 = por %p75, %p76
    %p78 = scmp.ne.s32.totalorder %s66, %s67
    %p79 = scmp.eq.s32.totalorder %s15, 1
    %p80 = por %p78, %p79
    %p82 = scmp.ne.s32.totalorder %s67, %s81
    %p83 = scmp.eq.s32.totalorder %s15, 0
    %p84 = por %p82, %p83
    %s85 = ssub.s32 %s9, %s16
    %p86 = scmp.eq.s32.totalorder %s85, 0
    %s88 = sadd.s32 %s87, 1
    %s89 = scalar_select %p86, %s87, %s88
    %p92 = pneg %p86
    %p93 = scmp.eq.s32.totalorder %s9, 1
    %p94 = por %p92, %p93
    %p95 = scmp.ne.s32.totalorder %s87, %s90
    %p96 = scmp.eq.s32.totalorder %s9, 0
    %p97 = por %p95, %p96
    %p98 = scmp.ne.s32.totalorder %s87, %s90
    %p99 = scmp.eq.s32.totalorder %s14, 1
    %p100 = por %p98, %p99
    %p101 = scmp.ne.s32.totalorder %s90, %s91
    %p102 = scmp.eq.s32.totalorder %s14, 0
    %p103 = por %p101, %p102
    %p104 = scmp.ne.s32.totalorder %s90, %s91
    %p105 = scmp.eq.s32.totalorder %s15, 1
    %p106 = por %p104, %p105
    %p108 = scmp.ne.s32.totalorder %s91, %s107
    %p109 = scmp.eq.s32.totalorder %s15, 0
    %p110 = por %p108, %p109
    %p111 = scmp.le.s32.totalorder 1, %s9
    %p112 = scmp.lt.s32.totalorder %s9, 3
    %p113 = pnand %p111, %p112
    %p114 = pneg %p113
    // Predicated region
    $region9: #{combined_ssd_forward.2} parent=5 // pred_check
      _
    $region10: #{combined_ssd_forward.2} parent=5 // pred_check_branch
      %116 = sbr.rel (%p113) target = $region12
    $region11: #{combined_ssd_forward.2} parent=5 // pred_region
      %s117 = ssub.s32 %s9, 1
      // Predicated region
      $region13: #{combined_ssd_forward.2} parent=11 // pred_check
        %p118 = pneg %p56
      $region14: #{combined_ssd_forward.2} parent=11 // pred_check_branch
        %120 = sbr.rel (%p118) target = $region16
      $region15: #{combined_ssd_forward.2} parent=11 // pred_region
        _
      $region16: #{combined_ssd_forward.2} parent=11 // pred_fallthru
        _
      // Predicated region
      $region17: #{combined_ssd_forward.2} parent=11 // pred_check
        %p121 = pneg %p77
      $region18: #{combined_ssd_forward.2} parent=11 // pred_check_branch
        %123 = sbr.rel (%p121) target = $region20
      $region19: #{combined_ssd_forward.2} parent=11 // pred_region
        _
      $region20: #{combined_ssd_forward.2} parent=11 // pred_fallthru
        _
    $region12: #{combined_ssd_forward.2} parent=5 // pred_fallthru
      _
    %p124 = scmp.lt.s32.totalorder %s9, 2
    // Predicated region
    $region21: #{combined_ssd_forward.2} parent=5 // pred_check
      %p125 = pneg %p124
    $region22: #{combined_ssd_forward.2} parent=5 // pred_check_branch
      %127 = sbr.rel (%p125) target = $region24
    $region23: #{combined_ssd_forward.2} parent=5 // pred_region
      // Predicated region
      $region25: #{combined_ssd_forward.2} parent=23 // pred_check
        %p128 = pneg %p29
      $region26: #{combined_ssd_forward.2} parent=23 // pred_check_branch
        %130 = sbr.rel (%p128) target = $region28
      $region27: #{combined_ssd_forward.2} parent=23 // pred_region
        %p131 = scmp.lt.s32.totalorder %s9, 1
        %s132 = scalar_select %p131, %s9, 1
        %s133 = smul.addr %s132, 8
        %s134 = smul.addr %s133, 4
        %s135 = scalar_lea.vmem %s0, %s134
      $region28: #{combined_ssd_forward.2} parent=23 // pred_fallthru
        _
    $region24: #{combined_ssd_forward.2} parent=5 // pred_fallthru
      _
    %p136 = scmp.le.s32.totalorder 1, %s9
    %p137 = scmp.lt.s32.totalorder %s9, 3
    %p138 = pnand %p136, %p137
    %p139 = pneg %p138
    // Predicated region
    $region29: #{combined_ssd_forward.2} parent=5 // pred_check
      _
    $region30: #{combined_ssd_forward.2} parent=5 // pred_check_branch
      %141 = sbr.rel (%p138) target = $region32
    $region31: #{combined_ssd_forward.2} parent=5 // pred_region
      %s142 = ssub.s32 %s9, 1
      %p143 = scmp.lt.s32.totalorder %s14, 1
      %s144 = scalar_select %p143, %s14, 1
      %s145 = smul.addr %s144, 8
      %s146 = smul.addr %s145, 4
      %s147 = scalar_lea.vmem %s0, %s146
      %p148 = pneg %p35
      %p149 = pneg %p32
      %p150 = pneg %p56
      %p151 = pneg %p53
      %p152 = pneg %p77
      %p153 = pneg %p74
      %p154 = pneg %p103
      %p155 = pneg %p100
      %p156 = scmp.lt.s32.totalorder %s14, 1
      %s157 = scalar_select %p156, %s14, 1
      %s158 = smul.addr %s157, 8
      %s159 = smul.addr %s158, 8
      %s160 = scalar_lea.vmem %s3, %s159
      %p161 = scmp.lt.s32.totalorder %s14, 1
      %s162 = scalar_select %p161, %s14, 1
      %s163 = smul.addr %s162, 8
      %s164 = smul.addr %s163, 4
      %s165 = scalar_lea.vmem %s0, %s164
      %p166 = scmp.lt.s32.totalorder %s14, 1
      %s167 = scalar_select %p166, %s14, 1
      %s168 = smul.addr %s167, 8
      %s169 = smul.addr %s168, 8
      %s170 = scalar_lea.vmem %s3, %s169
      %v172 = vld [vmem:[%s165] sm:$0xf]
      %v173 = vld [vmem:[%s165 + $0x4] sm:$0xf]
      %v174 = vld [vmem:[%s165 + $0x8] sm:$0xf]
      %v175 = vld [vmem:[%s165 + $0xc] sm:$0xf]
      %v176 = vld [vmem:[%s165 + $0x10] sm:$0xf]
      %v177 = vld [vmem:[%s165 + $0x14] sm:$0xf]
      %v178 = vld [vmem:[%s165 + $0x18] sm:$0xf]
      %v179 = vld [vmem:[%s165 + $0x1c] sm:$0xf]
      %v188 = vunpack.c.l.b16 %v172
      %v189 = vunpack.c.l.b16 %v173
      %v190 = vunpack.c.l.b16 %v174
      %v191 = vunpack.c.l.b16 %v175
      %v192 = vunpack.c.l.b16 %v176
      %v193 = vunpack.c.l.b16 %v177
      %v194 = vunpack.c.l.b16 %v178
      %v195 = vunpack.c.l.b16 %v179
      %v196 = vpack.c.b16 %v188, %v188
      %v197 = vpack.c.b16 %v189, %v189
      %v198 = vpack.c.b16 %v190, %v190
      %v199 = vpack.c.b16 %v191, %v191
      %v200 = vpack.c.b16 %v192, %v192
      %v201 = vpack.c.b16 %v193, %v193
      %v202 = vpack.c.b16 %v194, %v194
      %v203 = vpack.c.b16 %v195, %v195
      %v205 = vshrl.u32 %v196, 16
      %v207 = vrot.slane %v205, 7
      %v208 = vshll.u32 %v196, 16
      %v210 = vor.u32 %v207, %v208
      %v212 = vshrl.u32 %v197, 16
      %v214 = vrot.slane %v212, 7
      %v215 = vshll.u32 %v197, 16
      %v217 = vor.u32 %v214, %v215
      %v219 = vshrl.u32 %v198, 16
      %v221 = vrot.slane %v219, 7
      %v222 = vshll.u32 %v198, 16
      %v224 = vor.u32 %v221, %v222
      %v226 = vshrl.u32 %v199, 16
      %v228 = vrot.slane %v226, 7
      %v229 = vshll.u32 %v199, 16
      %v231 = vor.u32 %v228, %v229
      %v233 = vshrl.u32 %v200, 16
      %v235 = vrot.slane %v233, 7
      %v236 = vshll.u32 %v200, 16
      %v238 = vor.u32 %v235, %v236
      %v240 = vshrl.u32 %v201, 16
      %v242 = vrot.slane %v240, 7
      %v243 = vshll.u32 %v201, 16
      %v245 = vor.u32 %v242, %v243
      %v247 = vshrl.u32 %v202, 16
      %v249 = vrot.slane %v247, 7
      %v250 = vshll.u32 %v202, 16
      %v252 = vor.u32 %v249, %v250
      %v254 = vshrl.u32 %v203, 16
      %v256 = vrot.slane %v254, 7
      %v257 = vshll.u32 %v203, 16
      %v259 = vor.u32 %v256, %v257
      %vm268 = vcmask 1040384
      %vm269 = vsmask.f32 256
      %vm270 = vmand %vm268, %vm269
      %v271 = vsel %vm270, 0, %v210
      %v272 = vsel %vm270, 0, %v217
      %v273 = vsel %vm270, 0, %v224
      %v274 = vsel %vm270, 0, %v231
      %v275 = vsel %vm270, 0, %v238
      %v276 = vsel %vm270, 0, %v245
      %v277 = vsel %vm270, 0, %v252
      %v278 = vsel %vm270, 0, %v259
      %v279 = vrot.slane %v208, 1
      %v280 = vor.u32 %v205, %v279
      %v281 = vrot.slane %v215, 1
      %v282 = vor.u32 %v212, %v281
      %v283 = vrot.slane %v222, 1
      %v284 = vor.u32 %v219, %v283
      %v285 = vrot.slane %v229, 1
      %v286 = vor.u32 %v226, %v285
      %v287 = vrot.slane %v236, 1
      %v288 = vor.u32 %v233, %v287
      %v289 = vrot.slane %v243, 1
      %v290 = vor.u32 %v240, %v289
      %v291 = vrot.slane %v250, 1
      %v292 = vor.u32 %v247, %v291
      %v293 = vrot.slane %v257, 1
      %v294 = vor.u32 %v254, %v293
      %vm303 = vcmask 1043456
      %vm304 = vsmask.f32 3328
      %vm305 = vmand %vm303, %vm304
      %v306 = vsel %vm305, %v280, 0
      %v307 = vsel %vm305, %v282, 0
      %v308 = vsel %vm305, %v284, 0
      %v309 = vsel %vm305, %v286, 0
      %v310 = vsel %vm305, %v288, 0
      %v311 = vsel %vm305, %v290, 0
      %v312 = vsel %vm305, %v292, 0
      %v313 = vsel %vm305, %v294, 0
      %314 = vrot.lane.b32.xlu0 %v196, 32
      %v315 = vpop.permute.xlu0 %314
      %316 = vrot.lane.b32.xlu0 %v197, 32
      %v317 = vpop.permute.xlu0 %316
      %318 = vrot.lane.b32.xlu0 %v198, 32
      %v319 = vpop.permute.xlu0 %318
      %320 = vrot.lane.b32.xlu0 %v199, 32
      %v321 = vpop.permute.xlu0 %320
      %322 = vrot.lane.b32.xlu0 %v200, 32
      %v323 = vpop.permute.xlu0 %322
      %324 = vrot.lane.b32.xlu0 %v201, 32
      %v325 = vpop.permute.xlu0 %324
      %326 = vrot.lane.b32.xlu0 %v202, 32
      %v327 = vpop.permute.xlu0 %326
      %328 = vrot.lane.b32.xlu0 %v203, 32
      %v329 = vpop.permute.xlu0 %328
      %338 = vrot.lane.b32.xlu0 %v306, 64
      %v339 = vpop.permute.xlu0 %338
      %340 = vrot.lane.b32.xlu0 %v307, 64
      %v341 = vpop.permute.xlu0 %340
      %342 = vrot.lane.b32.xlu0 %v308, 64
      %v343 = vpop.permute.xlu0 %342
      %344 = vrot.lane.b32.xlu0 %v309, 64
      %v345 = vpop.permute.xlu0 %344
      %346 = vrot.lane.b32.xlu0 %v310, 64
      %v347 = vpop.permute.xlu0 %346
      %348 = vrot.lane.b32.xlu0 %v311, 64
      %v349 = vpop.permute.xlu0 %348
      %350 = vrot.lane.b32.xlu0 %v312, 64
      %v351 = vpop.permute.xlu0 %350
      %352 = vrot.lane.b32.xlu0 %v313, 64
      %v353 = vpop.permute.xlu0 %352
      %vm354 = vcmask 261120
      %v357 = vsel %vm354, %v271, %v315
      %v360 = vsel %vm354, %v272, %v317
      %v363 = vsel %vm354, %v273, %v319
      %v366 = vsel %vm354, %v274, %v321
      %v369 = vsel %vm354, %v275, %v323
      %v372 = vsel %vm354, %v276, %v325
      %v375 = vsel %vm354, %v277, %v327
      %v378 = vsel %vm354, %v278, %v329
      %vm379 = vcmask 523264
      %v381 = vsel %vm379, %v357, %v339
      %v383 = vsel %vm379, %v360, %v341
      %v385 = vsel %vm379, %v363, %v343
      %v387 = vsel %vm379, %v366, %v345
      %v389 = vsel %vm379, %v369, %v347
      %v391 = vsel %vm379, %v372, %v349
      %v393 = vsel %vm379, %v375, %v351
      %v395 = vsel %vm379, %v378, %v353
      %v396 = vld [vmem:[%s1] sm:$0xf]
      %v397 = vld [vmem:[%s1 + $0x4] sm:$0xf]
      %v398 = vld [vmem:[%s1 + $0x8] sm:$0xf]
      %v399 = vld [vmem:[%s1 + $0xc] sm:$0xf]
      %v400 = vld [vmem:[%s1 + $0x10] sm:$0xf]
      %v401 = vld [vmem:[%s1 + $0x14] sm:$0xf]
      %v402 = vld [vmem:[%s1 + $0x18] sm:$0xf]
      %v403 = vld [vmem:[%s1 + $0x1c] sm:$0xf]
      %v404 = vld [vmem:[%s1 + $0x20] sm:$0xf]
      %v405 = vld [vmem:[%s1 + $0x24] sm:$0xf]
      %v406 = vld [vmem:[%s1 + $0x28] sm:$0xf]
      %v407 = vld [vmem:[%s1 + $0x2c] sm:$0xf]
      %s408 = scalar_lea.vmem %s1, 48
      %v409 = vld [vmem:[%s408] sm:$0xf]
      %v410 = vld [vmem:[%s408 + $0x4] sm:$0xf]
      %v411 = vld [vmem:[%s408 + $0x8] sm:$0xf]
      %v412 = vld [vmem:[%s408 + $0xc] sm:$0xf]
      %v413 = vld [vmem:[%s408 + $0x10] sm:$0xf]
      %v414 = vld [vmem:[%s408 + $0x14] sm:$0xf]
      %v415 = vld [vmem:[%s408 + $0x18] sm:$0xf]
      %v416 = vld [vmem:[%s408 + $0x1c] sm:$0xf]
      %v417 = vld [vmem:[%s408 + $0x20] sm:$0xf]
      %v418 = vld [vmem:[%s408 + $0x24] sm:$0xf]
      %v419 = vld [vmem:[%s408 + $0x28] sm:$0xf]
      %v420 = vld [vmem:[%s408 + $0x2c] sm:$0xf]
      %v429 = vunpack.c.l.b16 %v381
      %v430 = vunpack.c.l.b16 %v383
      %v431 = vunpack.c.l.b16 %v385
      %v432 = vunpack.c.l.b16 %v387
      %v433 = vunpack.c.l.b16 %v389
      %v434 = vunpack.c.l.b16 %v391
      %v435 = vunpack.c.l.b16 %v393
      %v436 = vunpack.c.l.b16 %v395
      %v437 = vpack.c.b16 %v430, %v429
      %v438 = vpack.c.b16 %v432, %v431
      %v439 = vpack.c.b16 %v434, %v433
      %v440 = vpack.c.b16 %v436, %v435
      %v453 = vunpack.c.l.b16 %v409
      %v454 = vunpack.c.l.b16 %v410
      %v455 = vunpack.c.l.b16 %v411
      %v456 = vunpack.c.l.b16 %v412
      %v457 = vunpack.c.l.b16 %v413
      %v458 = vunpack.c.l.b16 %v414
      %v459 = vunpack.c.l.b16 %v415
      %v460 = vunpack.c.l.b16 %v416
      %v461 = vunpack.c.l.b16 %v417
      %v462 = vunpack.c.l.b16 %v418
      %v463 = vunpack.c.l.b16 %v419
      %v464 = vunpack.c.l.b16 %v420
      %v465 = vpack.c.b16 %v454, %v453
      %v466 = vpack.c.b16 %v456, %v455
      %v467 = vpack.c.b16 %v458, %v457
      %v468 = vpack.c.b16 %v460, %v459
      %v469 = vpack.c.b16 %v462, %v461
      %v470 = vpack.c.b16 %v464, %v463
      %vm477 = vcmask 785408
      %v479 = vsel %vm477, %v437, 0
      %v482 = vsel %vm477, %v438, 0
      %v485 = vsel %vm477, %v439, 0
      %v488 = vsel %vm477, %v440, 0
      %490 = vmatpush.bf16.msra.mxu0 0
      %491 = vmatpush.bf16.msra.mxu0 0
      %492 = vmatpush.bf16.msra.mxu0 %v470
      %493 = vmatpush.bf16.msra.mxu0 %v469
      %494 = vmatpush.bf16.msra.mxu0 %v468
      %495 = vmatpush.bf16.msra.mxu0 %v467
      %496 = vmatpush.bf16.msra.mxu0 %v466
      %497 = vmatpush.bf16.msra.mxu0 %v465
      %498 = vmatmul.bf16.gmra.mxu0 %v479
      %v499 = vpop.f32.mrf.mxu0
      %v500 = vadd.f32 0.0, %v499
      %v501 = vpop.f32.mrf.mxu0
      %v502 = vadd.f32 0.0, %v501
      %503 = vmatmul.bf16.gmra.mxu0 %v482
      %v504 = vpop.f32.mrf.mxu0
      %v505 = vadd.f32 0.0, %v504
      %v506 = vpop.f32.mrf.mxu0
      %v507 = vadd.f32 0.0, %v506
      %508 = vmatmul.bf16.gmra.mxu0 %v485
      %v509 = vpop.f32.mrf.mxu0
      %v510 = vadd.f32 0.0, %v509
      %v511 = vpop.f32.mrf.mxu0
      %v512 = vadd.f32 0.0, %v511
      %513 = vmatmul.bf16.gmra.mxu0 %v488
      %v514 = vpop.f32.mrf.mxu0
      %v515 = vadd.f32 0.0, %v514
      %v516 = vpop.f32.mrf.mxu0
      %v517 = vadd.f32 0.0, %v516
      %518 = vdwg.mxu0
      %v520 = vunpack.c.l.b16 0
      %v521 = vpack.c.b16 %v429, %v520
      %v522 = vpack.c.b16 %v431, %v430
      %v523 = vpack.c.b16 %v433, %v432
      %v524 = vpack.c.b16 %v435, %v434
      %v537 = vunpack.c.l.b16 %v396
      %v538 = vunpack.c.l.b16 %v397
      %v539 = vunpack.c.l.b16 %v398
      %v540 = vunpack.c.l.b16 %v399
      %v541 = vunpack.c.l.b16 %v400
      %v542 = vunpack.c.l.b16 %v401
      %v543 = vunpack.c.l.b16 %v402
      %v544 = vunpack.c.l.b16 %v403
      %v545 = vunpack.c.l.b16 %v404
      %v546 = vunpack.c.l.b16 %v405
      %v547 = vunpack.c.l.b16 %v406
      %v548 = vunpack.c.l.b16 %v407
      %v549 = vpack.c.b16 %v538, %v537
      %v550 = vpack.c.b16 %v540, %v539
      %v551 = vpack.c.b16 %v542, %v541
      %v552 = vpack.c.b16 %v544, %v543
      %v553 = vpack.c.b16 %v546, %v545
      %v554 = vpack.c.b16 %v548, %v547
      %v562 = vsel %vm477, %v521, 0
      %v565 = vsel %vm477, %v522, 0
      %v568 = vsel %vm477, %v523, 0
      %v571 = vsel %vm477, %v524, 0
      %573 = vmatpush.bf16.msra.mxu0 0
      %574 = vmatpush.bf16.msra.mxu0 0
      %575 = vmatpush.bf16.msra.mxu0 %v554
      %576 = vmatpush.bf16.msra.mxu0 %v553
      %577 = vmatpush.bf16.msra.mxu0 %v552
      %578 = vmatpush.bf16.msra.mxu0 %v551
      %579 = vmatpush.bf16.msra.mxu0 %v550
      %580 = vmatpush.bf16.msra.mxu0 %v549
      %581 = vmatmul.bf16.gmra.mxu0 %v562
      %v582 = vpop.f32.mrf.mxu0
      %v583 = vadd.f32 %v500, %v582
      %v584 = vpop.f32.mrf.mxu0
      %v585 = vadd.f32 %v502, %v584
      %586 = vmatmul.bf16.gmra.mxu0 %v565
      %v587 = vpop.f32.mrf.mxu0
      %v588 = vadd.f32 %v505, %v587
      %v589 = vpop.f32.mrf.mxu0
      %v590 = vadd.f32 %v507, %v589
      %591 = vmatmul.bf16.gmra.mxu0 %v568
      %v592 = vpop.f32.mrf.mxu0
      %v593 = vadd.f32 %v510, %v592
      %v594 = vpop.f32.mrf.mxu0
      %v595 = vadd.f32 %v512, %v594
      %596 = vmatmul.bf16.gmra.mxu0 %v571
      %v597 = vpop.f32.mrf.mxu0
      %v598 = vadd.f32 %v515, %v597
      %v599 = vpop.f32.mrf.mxu0
      %v600 = vadd.f32 %v517, %v599
      %601 = vdwg.mxu0
      %s602 = scalar_lea.vmem %s1, 96
      %v603 = vld [vmem:[%s602] sm:$0xf]
      %v604 = vld [vmem:[%s602 + $0x4] sm:$0xf]
      %v605 = vld [vmem:[%s602 + $0x8] sm:$0xf]
      %v606 = vld [vmem:[%s602 + $0xc] sm:$0xf]
      %v607 = vld [vmem:[%s602 + $0x10] sm:$0xf]
      %v608 = vld [vmem:[%s602 + $0x14] sm:$0xf]
      %v609 = vld [vmem:[%s602 + $0x18] sm:$0xf]
      %v610 = vld [vmem:[%s602 + $0x1c] sm:$0xf]
      %v611 = vld [vmem:[%s602 + $0x20] sm:$0xf]
      %v612 = vld [vmem:[%s602 + $0x24] sm:$0xf]
      %v613 = vld [vmem:[%s602 + $0x28] sm:$0xf]
      %v614 = vld [vmem:[%s602 + $0x2c] sm:$0xf]
      %v615 = vpack.c.b16 %v520, %v436
      %v628 = vunpack.c.l.b16 %v603
      %v629 = vunpack.c.l.b16 %v604
      %v630 = vunpack.c.l.b16 %v605
      %v631 = vunpack.c.l.b16 %v606
      %v632 = vunpack.c.l.b16 %v607
      %v633 = vunpack.c.l.b16 %v608
      %v634 = vunpack.c.l.b16 %v609
      %v635 = vunpack.c.l.b16 %v610
      %v636 = vunpack.c.l.b16 %v611
      %v637 = vunpack.c.l.b16 %v612
      %v638 = vunpack.c.l.b16 %v613
      %v639 = vunpack.c.l.b16 %v614
      %v640 = vpack.c.b16 %v629, %v628
      %v641 = vpack.c.b16 %v631, %v630
      %v642 = vpack.c.b16 %v633, %v632
      %v643 = vpack.c.b16 %v635, %v634
      %v644 = vpack.c.b16 %v637, %v636
      %v645 = vpack.c.b16 %v639, %v638
      %v653 = vsel %vm477, %v615, 0
      %655 = vmatpush.bf16.msra.mxu0 0
      %656 = vmatpush.bf16.msra.mxu0 0
      %657 = vmatpush.bf16.msra.mxu0 %v645
      %658 = vmatpush.bf16.msra.mxu0 %v644
      %659 = vmatpush.bf16.msra.mxu0 %v643
      %660 = vmatpush.bf16.msra.mxu0 %v642
      %661 = vmatpush.bf16.msra.mxu0 %v641
      %662 = vmatpush.bf16.msra.mxu0 %v640
      %663 = vmatmul.bf16.gmra.mxu0 %v565
      %v664 = vpop.f32.mrf.mxu0
      %v665 = vadd.f32 0.0, %v664
      %v666 = vpop.f32.mrf.mxu0
      %v667 = vadd.f32 0.0, %v666
      %668 = vmatmul.bf16.gmra.mxu0 %v568
      %v669 = vpop.f32.mrf.mxu0
      %v670 = vadd.f32 0.0, %v669
      %v671 = vpop.f32.mrf.mxu0
      %v672 = vadd.f32 0.0, %v671
      %673 = vmatmul.bf16.gmra.mxu0 %v571
      %v674 = vpop.f32.mrf.mxu0
      %v675 = vadd.f32 0.0, %v674
      %v676 = vpop.f32.mrf.mxu0
      %v677 = vadd.f32 0.0, %v676
      %678 = vmatmul.bf16.gmra.mxu0 %v653
      %v679 = vpop.f32.mrf.mxu0
      %v680 = vadd.f32 0.0, %v679
      %v681 = vpop.f32.mrf.mxu0
      %v682 = vadd.f32 0.0, %v681
      %683 = vdwg.mxu0
      %v684 = vadd.f32 %v583, %v665
      %v685 = vadd.f32 %v585, %v667
      %v686 = vadd.f32 %v588, %v670
      %v687 = vadd.f32 %v590, %v672
      %v688 = vadd.f32 %v593, %v675
      %v689 = vadd.f32 %v595, %v677
      %v690 = vadd.f32 %v598, %v680
      %v691 = vadd.f32 %v600, %v682
      %v692 = vld [vmem:[%s2] sm:$0x1]
      %v694 = vperm.slane %v692, 0
      %v696 = vadd.f32 %v684, %v694
      %v697 = vadd.f32 %v685, %v694
      %v698 = vadd.f32 %v686, %v694
      %v699 = vadd.f32 %v687, %v694
      %v700 = vadd.f32 %v688, %v694
      %v701 = vadd.f32 %v689, %v694
      %v702 = vadd.f32 %v690, %v694
      %v703 = vadd.f32 %v691, %v694
      %704 = vst [vmem:[%s170] sm:$0xff] %v696
      %705 = vst [vmem:[%s170 + $0x8] sm:$0xff] %v697
      %706 = vst [vmem:[%s170 + $0x10] sm:$0xff] %v698
      %707 = vst [vmem:[%s170 + $0x18] sm:$0xff] %v699
      %708 = vst [vmem:[%s170 + $0x20] sm:$0xff] %v700
      %709 = vst [vmem:[%s170 + $0x28] sm:$0xff] %v701
      %710 = vst [vmem:[%s170 + $0x30] sm:$0xff] %v702
      %711 = vst [vmem:[%s170 + $0x38] sm:$0xff] %v703
      %p712 = scmp.lt.s32.totalorder %s14, 1
      %s713 = scalar_select %p712, %s14, 1
      %s714 = smul.addr %s713, 8
      %s715 = smul.addr %s714, 8
      %s716 = scalar_lea.vmem %s3, %s715
      // Predicated region
      $region33: #{combined_ssd_forward.2} parent=31 // pred_check
        %p717 = pneg %p100
      $region34: #{combined_ssd_forward.2} parent=31 // pred_check_branch
        %719 = sbr.rel (%p717) target = $region36
      $region35: #{combined_ssd_forward.2} parent=31 // pred_region
        _
      $region36: #{combined_ssd_forward.2} parent=31 // pred_fallthru
        _
    $region32: #{combined_ssd_forward.2} parent=5 // pred_fallthru
      _
    %p720 = scmp.le.s32.totalorder 2, %s9
    // Predicated region
    $region37: #{combined_ssd_forward.2} parent=5 // pred_check
      %p721 = pneg %p720
    $region38: #{combined_ssd_forward.2} parent=5 // pred_check_branch
      %723 = sbr.rel (%p721) target = $region40
    $region39: #{combined_ssd_forward.2} parent=5 // pred_region
      %s724 = ssub.s32 %s9, 2
      // Predicated region
      $region41: #{combined_ssd_forward.2} parent=39 // pred_check
        %p725 = pneg %p106
      $region42: #{combined_ssd_forward.2} parent=39 // pred_check_branch
        %727 = sbr.rel (%p725) target = $region44
      $region43: #{combined_ssd_forward.2} parent=39 // pred_region
        %p728 = scmp.lt.s32.totalorder %s15, 1
        %s729 = scalar_select %p728, %s15, 1
        %s730 = smul.addr %s729, 8
        %s731 = smul.addr %s730, 8
        %s732 = scalar_lea.vmem %s3, %s731
      $region44: #{combined_ssd_forward.2} parent=39 // pred_fallthru
        _
    $region40: #{combined_ssd_forward.2} parent=5 // pred_fallthru
      _
  $region6: #{combined_ssd_forward.2} parent=0 // loop_footer
    %s13 = sadd.s32 1, %s9
  $region7: #{combined_ssd_forward.2} parent=0 // loop_footer_branch
    %8 = sbr.rel target = $region3
  $region8: #{combined_ssd_forward.2} parent=0 // loop_exit
    _

// kernel: combined_ssd_forward.3
$region0: #{combined_ssd_forward.3}
  #allocation0 [shape = 'u32[]', space=smem, size = 0x4, offset = 0x4, fixed_abs, tag = 'smem constant byte address 0x4 - core index']
  #allocation1 [shape = 'u32[72,128]{1,0:T(1,128)}', space=vmem, size = 0x9000, scoped, tag = 'internal scratch']
  %s0 = inlined_call_operand.vmem [shape: bf16[2,4,4,64], index: 0, kind: input, shape index: {}]
  %s1 = inlined_call_operand.vmem [shape: bf16[3,192,128], index: 1, kind: input, shape index: {}]
  %s2 = inlined_call_operand.vmem [shape: f32[1,128], index: 2, kind: input, shape index: {}]
  %s3 = inlined_call_operand.vmem [shape: f32[2,16,128], index: 3, kind: output, shape index: {}]
  %s4 = sld [smem:[#allocation0]]
  $region45: #{combined_ssd_forward.3} parent=0
    _
  %s6 = ssub.s32 1, %s4
  %s7 = scalar_select 0, %s6, %s4
  loop: start=0, step=1, limit=4
  $region2: #{combined_ssd_forward.3} parent=0 // loop_pre_header
    _
  $region3: #{combined_ssd_forward.3} parent=0 // loop_header
    %s9 = sphi 0, %s13
    %p10 = scmp.ge.s32.totalorder %s9, 4
    %s19 = sphi 0, %s21
    %s22 = sphi 0, %s19
    %s23 = sphi 0, %s22
    %s39 = sphi 0, %s23
    %s43 = sphi 0, %s43
    %s45 = sphi 0, %s43
    %s46 = sphi 0, %s45
    %s60 = sphi 0, %s46
    %s64 = sphi 0, %s64
    %s66 = sphi 0, %s64
    %s67 = sphi 0, %s66
    %s81 = sphi 0, %s67
    %s87 = sphi 0, %s89
    %s90 = sphi 0, %s87
    %s91 = sphi 0, %s90
    %s107 = sphi 0, %s91
  $region4: #{combined_ssd_forward.3} parent=0 // loop_header_branch
    %12 = sbr.rel (%p10) target = $region8
  $region5: #{combined_ssd_forward.3} parent=0 // loop_body
    %s14 = ssub.s32 %s9, 1
    %s15 = ssub.s32 %s9, 2
    %s16 = sadd.s32 %s9, 1
    %s17 = ssub.s32 %s9, %s16
    %p18 = scmp.eq.s32.totalorder %s17, 0
    %s20 = sadd.s32 %s19, 1
    %s21 = scalar_select %p18, %s19, %s20
    %p24 = pneg %p18
    %p25 = scmp.eq.s32.totalorder %s9, 1
    %p26 = por %p24, %p25
    %p27 = scmp.ne.s32.totalorder %s19, %s22
    %p28 = scmp.eq.s32.totalorder %s9, 0
    %p29 = por %p27, %p28
    %p30 = scmp.ne.s32.totalorder %s19, %s22
    %p31 = scmp.eq.s32.totalorder %s14, 1
    %p32 = por %p30, %p31
    %p33 = scmp.ne.s32.totalorder %s22, %s23
    %p34 = scmp.eq.s32.totalorder %s14, 0
    %p35 = por %p33, %p34
    %p36 = scmp.ne.s32.totalorder %s22, %s23
    %p37 = scmp.eq.s32.totalorder %s15, 1
    %p38 = por %p36, %p37
    %p40 = scmp.ne.s32.totalorder %s23, %s39
    %p41 = scmp.eq.s32.totalorder %s15, 0
    %p42 = por %p40, %p41
    %s44 = sadd.s32 %s43, 1
    %p47 = scmp.eq.s32.totalorder %s9, 1
    %p48 = scmp.ne.s32.totalorder %s43, %s45
    %p49 = scmp.eq.s32.totalorder %s9, 0
    %p50 = por %p48, %p49
    %p51 = scmp.ne.s32.totalorder %s43, %s45
    %p52 = scmp.eq.s32.totalorder %s14, 1
    %p53 = por %p51, %p52
    %p54 = scmp.ne.s32.totalorder %s45, %s46
    %p55 = scmp.eq.s32.totalorder %s14, 0
    %p56 = por %p54, %p55
    %p57 = scmp.ne.s32.totalorder %s45, %s46
    %p58 = scmp.eq.s32.totalorder %s15, 1
    %p59 = por %p57, %p58
    %p61 = scmp.ne.s32.totalorder %s46, %s60
    %p62 = scmp.eq.s32.totalorder %s15, 0
    %p63 = por %p61, %p62
    %s65 = sadd.s32 %s64, 1
    %p68 = scmp.eq.s32.totalorder %s9, 1
    %p69 = scmp.ne.s32.totalorder %s64, %s66
    %p70 = scmp.eq.s32.totalorder %s9, 0
    %p71 = por %p69, %p70
    %p72 = scmp.ne.s32.totalorder %s64, %s66
    %p73 = scmp.eq.s32.totalorder %s14, 1
    %p74 = por %p72, %p73
    %p75 = scmp.ne.s32.totalorder %s66, %s67
    %p76 = scmp.eq.s32.totalorder %s14, 0
    %p77 = por %p75, %p76
    %p78 = scmp.ne.s32.totalorder %s66, %s67
    %p79 = scmp.eq.s32.totalorder %s15, 1
    %p80 = por %p78, %p79
    %p82 = scmp.ne.s32.totalorder %s67, %s81
    %p83 = scmp.eq.s32.totalorder %s15, 0
    %p84 = por %p82, %p83
    %s85 = ssub.s32 %s9, %s16
    %p86 = scmp.eq.s32.totalorder %s85, 0
    %s88 = sadd.s32 %s87, 1
    %s89 = scalar_select %p86, %s87, %s88
    %p92 = pneg %p86
    %p93 = scmp.eq.s32.totalorder %s9, 1
    %p94 = por %p92, %p93
    %p95 = scmp.ne.s32.totalorder %s87, %s90
    %p96 = scmp.eq.s32.totalorder %s9, 0
    %p97 = por %p95, %p96
    %p98 = scmp.ne.s32.totalorder %s87, %s90
    %p99 = scmp.eq.s32.totalorder %s14, 1
    %p100 = por %p98, %p99
    %p101 = scmp.ne.s32.totalorder %s90, %s91
    %p102 = scmp.eq.s32.totalorder %s14, 0
    %p103 = por %p101, %p102
    %p104 = scmp.ne.s32.totalorder %s90, %s91
    %p105 = scmp.eq.s32.totalorder %s15, 1
    %p106 = por %p104, %p105
    %p108 = scmp.ne.s32.totalorder %s91, %s107
    %p109 = scmp.eq.s32.totalorder %s15, 0
    %p110 = por %p108, %p109
    %p111 = scmp.le.s32.totalorder 1, %s9
    %p112 = scmp.lt.s32.totalorder %s9, 3
    %p113 = pnand %p111, %p112
    %p114 = pneg %p113
    // Predicated region
    $region9: #{combined_ssd_forward.3} parent=5 // pred_check
      _
    $region10: #{combined_ssd_forward.3} parent=5 // pred_check_branch
      %116 = sbr.rel (%p113) target = $region12
    $region11: #{combined_ssd_forward.3} parent=5 // pred_region
      %s117 = ssub.s32 %s9, 1
      // Predicated region
      $region13: #{combined_ssd_forward.3} parent=11 // pred_check
        %p118 = pneg %p56
      $region14: #{combined_ssd_forward.3} parent=11 // pred_check_branch
        %120 = sbr.rel (%p118) target = $region16
      $region15: #{combined_ssd_forward.3} parent=11 // pred_region
        _
      $region16: #{combined_ssd_forward.3} parent=11 // pred_fallthru
        _
      // Predicated region
      $region17: #{combined_ssd_forward.3} parent=11 // pred_check
        %p121 = pneg %p77
      $region18: #{combined_ssd_forward.3} parent=11 // pred_check_branch
        %123 = sbr.rel (%p121) target = $region20
      $region19: #{combined_ssd_forward.3} parent=11 // pred_region
        _
      $region20: #{combined_ssd_forward.3} parent=11 // pred_fallthru
        _
    $region12: #{combined_ssd_forward.3} parent=5 // pred_fallthru
      _
    %p124 = scmp.lt.s32.totalorder %s9, 2
    // Predicated region
    $region21: #{combined_ssd_forward.3} parent=5 // pred_check
      %p125 = pneg %p124
    $region22: #{combined_ssd_forward.3} parent=5 // pred_check_branch
      %127 = sbr.rel (%p125) target = $region24
    $region23: #{combined_ssd_forward.3} parent=5 // pred_region
      // Predicated region
      $region25: #{combined_ssd_forward.3} parent=23 // pred_check
        %p128 = pneg %p29
      $region26: #{combined_ssd_forward.3} parent=23 // pred_check_branch
        %130 = sbr.rel (%p128) target = $region28
      $region27: #{combined_ssd_forward.3} parent=23 // pred_region
        %p131 = scmp.lt.s32.totalorder %s9, 1
        %s132 = scalar_select %p131, %s9, 1
        %s133 = smul.addr %s132, 4
        %s134 = smul.addr %s133, 2
        %s135 = scalar_lea.vmem %s0, %s134
      $region28: #{combined_ssd_forward.3} parent=23 // pred_fallthru
        _
    $region24: #{combined_ssd_forward.3} parent=5 // pred_fallthru
      _
    %p136 = scmp.le.s32.totalorder 1, %s9
    %p137 = scmp.lt.s32.totalorder %s9, 3
    %p138 = pnand %p136, %p137
    %p139 = pneg %p138
    // Predicated region
    $region29: #{combined_ssd_forward.3} parent=5 // pred_check
      _
    $region30: #{combined_ssd_forward.3} parent=5 // pred_check_branch
      %141 = sbr.rel (%p138) target = $region32
    $region31: #{combined_ssd_forward.3} parent=5 // pred_region
      %s142 = ssub.s32 %s9, 1
      %p143 = scmp.lt.s32.totalorder %s14, 1
      %s144 = scalar_select %p143, %s14, 1
      %s145 = smul.addr %s144, 4
      %s146 = smul.addr %s145, 2
      %s147 = scalar_lea.vmem %s0, %s146
      %p148 = pneg %p35
      %p149 = pneg %p32
      %p150 = pneg %p56
      %p151 = pneg %p53
      %p152 = pneg %p77
      %p153 = pneg %p74
      %p154 = pneg %p103
      %p155 = pneg %p100
      %p156 = scmp.lt.s32.totalorder %s14, 1
      %s157 = scalar_select %p156, %s14, 1
      %s158 = smul.addr %s157, 2
      %s159 = smul.addr %s158, 8
      %s160 = scalar_lea.vmem %s3, %s159
      %p161 = scmp.lt.s32.totalorder %s14, 1
      %s162 = scalar_select %p161, %s14, 1
      %s163 = smul.addr %s162, 4
      %s164 = smul.addr %s163, 2
      %s165 = scalar_lea.vmem %s0, %s164
      %p166 = scmp.lt.s32.totalorder %s14, 1
      %s167 = scalar_select %p166, %s14, 1
      %s168 = smul.addr %s167, 2
      %s169 = smul.addr %s168, 8
      %s170 = scalar_lea.vmem %s3, %s169
      %v172 = vld [vmem:[%s165] sm:$0x3]
      %v173 = vld [vmem:[%s165 + $0x2] sm:$0x3]
      %v174 = vld [vmem:[%s165 + $0x4] sm:$0x3]
      %v175 = vld [vmem:[%s165 + $0x6] sm:$0x3]
      %177 = vst [vmem:[#allocation1] ss:$4 sm:$0xff] %v172
      %v178 = vld.sshfl [vmem:[#allocation1] sm:$0xff pattern:$0x73625140]
      %s180 = scalar_lea.vmem [#allocation1], 32
      %181 = vst [vmem:[%s180] ss:$4 sm:$0xff] %v173
      %v182 = vld.sshfl [vmem:[#allocation1 + $0x20] sm:$0xff pattern:$0x73625140]
      %184 = vst [vmem:[#allocation1] ss:$4 sm:$0xff] %v174
      %v185 = vld.sshfl [vmem:[#allocation1] sm:$0xff pattern:$0x73625140]
      %187 = vst [vmem:[%s180] ss:$4 sm:$0xff] %v175
      %v188 = vld.sshfl [vmem:[#allocation1 + $0x20] sm:$0xff pattern:$0x73625140]
      %v189 = vshrl.u32 %v178, 16
      %v191 = vrot.slane %v189, 7
      %v192 = vshll.u32 %v178, 16
      %v194 = vor.u32 %v191, %v192
      %v195 = vshrl.u32 %v182, 16
      %v197 = vrot.slane %v195, 7
      %v198 = vshll.u32 %v182, 16
      %v200 = vor.u32 %v197, %v198
      %v201 = vshrl.u32 %v185, 16
      %v203 = vrot.slane %v201, 7
      %v204 = vshll.u32 %v185, 16
      %v206 = vor.u32 %v203, %v204
      %v207 = vshrl.u32 %v188, 16
      %v209 = vrot.slane %v207, 7
      %v210 = vshll.u32 %v188, 16
      %v212 = vor.u32 %v209, %v210
      %vm217 = vcmask 1040384
      %vm218 = vsmask.f32 256
      %vm219 = vmand %vm217, %vm218
      %v220 = vsel %vm219, 0, %v194
      %v221 = vsel %vm219, 0, %v200
      %v222 = vsel %vm219, 0, %v206
      %v223 = vsel %vm219, 0, %v212
      %224 = vst [vmem:[#allocation1] ss:$4 sm:$0xff] %v172
      %v225 = vld.sshfl [vmem:[#allocation1] sm:$0xff pattern:$0x73625140]
      %s226 = scalar_lea.vmem [#allocation1], 32
      %227 = vst [vmem:[%s226] ss:$4 sm:$0xff] %v173
      %v228 = vld.sshfl [vmem:[#allocation1 + $0x20] sm:$0xff pattern:$0x73625140]
      %229 = vst [vmem:[#allocation1] ss:$4 sm:$0xff] %v174
      %v230 = vld.sshfl [vmem:[#allocation1] sm:$0xff pattern:$0x73625140]
      %231 = vst [vmem:[%s226] ss:$4 sm:$0xff] %v175
      %v232 = vld.sshfl [vmem:[#allocation1 + $0x20] sm:$0xff pattern:$0x73625140]
      %v233 = vshrl.u32 %v225, 16
      %v235 = vshll.u32 %v225, 16
      %v237 = vrot.slane %v235, 1
      %v238 = vor.u32 %v233, %v237
      %v239 = vshrl.u32 %v228, 16
      %v241 = vshll.u32 %v228, 16
      %v243 = vrot.slane %v241, 1
      %v244 = vor.u32 %v239, %v243
      %v245 = vshrl.u32 %v230, 16
      %v247 = vshll.u32 %v230, 16
      %v249 = vrot.slane %v247, 1
      %v250 = vor.u32 %v245, %v249
      %v251 = vshrl.u32 %v232, 16
      %v253 = vshll.u32 %v232, 16
      %v255 = vrot.slane %v253, 1
      %v256 = vor.u32 %v251, %v255
      %vm261 = vcmask 1041408
      %vm262 = vsmask.f32 1280
      %vm263 = vmand %vm261, %vm262
      %v264 = vsel %vm263, %v238, 0
      %v265 = vsel %vm263, %v244, 0
      %v266 = vsel %vm263, %v250, 0
      %v267 = vsel %vm263, %v256, 0
      %268 = vst [vmem:[#allocation1] ss:$4 sm:$0xff] %v172
      %v269 = vld.sshfl [vmem:[#allocation1] sm:$0xff pattern:$0x73625140]
      %s271 = scalar_lea.vmem [#allocation1], 32
      %272 = vst [vmem:[%s271] ss:$4 sm:$0xff] %v173
      %v273 = vld.sshfl [vmem:[#allocation1 + $0x20] sm:$0xff pattern:$0x73625140]
      %275 = vst [vmem:[#allocation1] ss:$4 sm:$0xff] %v174
      %v276 = vld.sshfl [vmem:[#allocation1] sm:$0xff pattern:$0x73625140]
      %278 = vst [vmem:[%s271] ss:$4 sm:$0xff] %v175
      %v279 = vld.sshfl [vmem:[#allocation1 + $0x20] sm:$0xff pattern:$0x73625140]
      %281 = vrot.lane.b32.xlu0 %v269, 64
      %v282 = vpop.permute.xlu0 %281
      %283 = vrot.lane.b32.xlu0 %v273, 64
      %v284 = vpop.permute.xlu0 %283
      %285 = vrot.lane.b32.xlu0 %v276, 64
      %v286 = vpop.permute.xlu0 %285
      %287 = vrot.lane.b32.xlu0 %v279, 64
      %v288 = vpop.permute.xlu0 %287
      %vm289 = vcmask 523264
      %v292 = vsel %vm289, %v220, %v282
      %v295 = vsel %vm289, %v221, %v284
      %v298 = vsel %vm289, %v222, %v286
      %v301 = vsel %vm289, %v223, %v288
      %v306 = vrot.slane 0, 6
      %v307 = vrot.slane %v264, 6
      %v308 = vrot.slane %v265, 6
      %v309 = vrot.slane %v266, 6
      %vm310 = vcmask 1041408
      %v313 = vsel %vm310, 0, %v306
      %v315 = vsel %vm310, %v292, %v307
      %v317 = vsel %vm310, %v295, %v308
      %v319 = vsel %vm310, %v298, %v309
      %v320 = vld [vmem:[%s1] sm:$0xf]
      %v321 = vld [vmem:[%s1 + $0x4] sm:$0xf]
      %v322 = vld [vmem:[%s1 + $0x8] sm:$0xf]
      %v323 = vld [vmem:[%s1 + $0xc] sm:$0xf]
      %v324 = vld [vmem:[%s1 + $0x10] sm:$0xf]
      %v325 = vld [vmem:[%s1 + $0x14] sm:$0xf]
      %v326 = vld [vmem:[%s1 + $0x18] sm:$0xf]
      %v327 = vld [vmem:[%s1 + $0x1c] sm:$0xf]
      %v328 = vld [vmem:[%s1 + $0x20] sm:$0xf]
      %v329 = vld [vmem:[%s1 + $0x24] sm:$0xf]
      %v330 = vld [vmem:[%s1 + $0x28] sm:$0xf]
      %v331 = vld [vmem:[%s1 + $0x2c] sm:$0xf]
      %v332 = vld [vmem:[%s1 + $0x30] sm:$0xf]
      %v333 = vld [vmem:[%s1 + $0x34] sm:$0xf]
      %v334 = vld [vmem:[%s1 + $0x38] sm:$0xf]
      %v335 = vld [vmem:[%s1 + $0x3c] sm:$0xf]
      %v336 = vld [vmem:[%s1 + $0x40] sm:$0xf]
      %v337 = vld [vmem:[%s1 + $0x44] sm:$0xf]
      %v338 = vld [vmem:[%s1 + $0x48] sm:$0xf]
      %v339 = vld [vmem:[%s1 + $0x4c] sm:$0xf]
      %v340 = vld [vmem:[%s1 + $0x50] sm:$0xf]
      %v341 = vld [vmem:[%s1 + $0x54] sm:$0xf]
      %v342 = vld [vmem:[%s1 + $0x58] sm:$0xf]
      %v343 = vld [vmem:[%s1 + $0x5c] sm:$0xf]
      %v345 = vrot.slane %v267, 6
      %v347 = vsel %vm310, %v301, %v345
      %s348 = scalar_lea.vmem %s1, 96
      %v349 = vld [vmem:[%s348] sm:$0xf]
      %v350 = vld [vmem:[%s348 + $0x4] sm:$0xf]
      %v351 = vld [vmem:[%s348 + $0x8] sm:$0xf]
      %v352 = vld [vmem:[%s348 + $0xc] sm:$0xf]
      %v353 = vld [vmem:[%s348 + $0x10] sm:$0xf]
      %v354 = vld [vmem:[%s348 + $0x14] sm:$0xf]
      %v355 = vld [vmem:[%s348 + $0x18] sm:$0xf]
      %v356 = vld [vmem:[%s348 + $0x1c] sm:$0xf]
      %v357 = vld [vmem:[%s348 + $0x20] sm:$0xf]
      %v358 = vld [vmem:[%s348 + $0x24] sm:$0xf]
      %v359 = vld [vmem:[%s348 + $0x28] sm:$0xf]
      %v360 = vld [vmem:[%s348 + $0x2c] sm:$0xf]
      %v361 = vld [vmem:[%s348 + $0x30] sm:$0xf]
      %v362 = vld [vmem:[%s348 + $0x34] sm:$0xf]
      %v363 = vld [vmem:[%s348 + $0x38] sm:$0xf]
      %v364 = vld [vmem:[%s348 + $0x3c] sm:$0xf]
      %v365 = vld [vmem:[%s348 + $0x40] sm:$0xf]
      %v366 = vld [vmem:[%s348 + $0x44] sm:$0xf]
      %v367 = vld [vmem:[%s348 + $0x48] sm:$0xf]
      %v368 = vld [vmem:[%s348 + $0x4c] sm:$0xf]
      %v369 = vld [vmem:[%s348 + $0x50] sm:$0xf]
      %v370 = vld [vmem:[%s348 + $0x54] sm:$0xf]
      %v371 = vld [vmem:[%s348 + $0x58] sm:$0xf]
      %v372 = vld [vmem:[%s348 + $0x5c] sm:$0xf]
      %373 = vst [vmem:[#allocation1] ss:$4 sm:$0xff] %v315
      %s374 = scalar_lea.vmem [#allocation1], 1
      %375 = vst [vmem:[%s374] ss:$4 sm:$0xff] %v317
      %s376 = scalar_lea.vmem [#allocation1], 2
      %377 = vst [vmem:[%s376] ss:$4 sm:$0xff] %v319
      %s378 = scalar_lea.vmem [#allocation1], 3
      %379 = vst [vmem:[%s378] ss:$4 sm:$0xff] %v347
      %v380 = vld.sshfl [vmem:[#allocation1] sm:$0xff pattern:$0x73625140]
      %v381 = vld.sshfl [vmem:[#allocation1 + $0x8] sm:$0xff pattern:$0x73625140]
      %v407 = vunpack.c.l.b16 %v349
      %v408 = vunpack.c.l.b16 %v350
      %v409 = vunpack.c.l.b16 %v351
      %v410 = vunpack.c.l.b16 %v352
      %v411 = vunpack.c.l.b16 %v353
      %v412 = vunpack.c.l.b16 %v354
      %v413 = vunpack.c.l.b16 %v355
      %v414 = vunpack.c.l.b16 %v356
      %v415 = vunpack.c.l.b16 %v357
      %v416 = vunpack.c.l.b16 %v358
      %v417 = vunpack.c.l.b16 %v359
      %v418 = vunpack.c.l.b16 %v360
      %v419 = vunpack.c.l.b16 %v361
      %v420 = vunpack.c.l.b16 %v362
      %v421 = vunpack.c.l.b16 %v363
      %v422 = vunpack.c.l.b16 %v364
      %v423 = vunpack.c.l.b16 %v365
      %v424 = vunpack.c.l.b16 %v366
      %v425 = vunpack.c.l.b16 %v367
      %v426 = vunpack.c.l.b16 %v368
      %v427 = vunpack.c.l.b16 %v369
      %v428 = vunpack.c.l.b16 %v370
      %v429 = vunpack.c.l.b16 %v371
      %v430 = vunpack.c.l.b16 %v372
      %v431 = vpack.c.b16 %v408, %v407
      %v432 = vpack.c.b16 %v410, %v409
      %v433 = vpack.c.b16 %v412, %v411
      %v434 = vpack.c.b16 %v414, %v413
      %v435 = vpack.c.b16 %v416, %v415
      %v436 = vpack.c.b16 %v418, %v417
      %v437 = vpack.c.b16 %v420, %v419
      %v438 = vpack.c.b16 %v422, %v421
      %v439 = vpack.c.b16 %v424, %v423
      %v440 = vpack.c.b16 %v426, %v425
      %v441 = vpack.c.b16 %v428, %v427
      %v442 = vpack.c.b16 %v430, %v429
      %v455 = vsel %vm289, %v381, 0
      %457 = vmatpush.bf16.msra.mxu0 %v438
      %458 = vmatpush.bf16.msra.mxu0 %v437
      %459 = vmatpush.bf16.msra.mxu0 %v436
      %460 = vmatpush.bf16.msra.mxu0 %v435
      %461 = vmatpush.bf16.msra.mxu0 %v434
      %462 = vmatpush.bf16.msra.mxu0 %v433
      %463 = vmatpush.bf16.msra.mxu0 %v432
      %464 = vmatpush.bf16.msra.mxu0 %v431
      %465 = vmatmul.bf16.gmra.mxu0 %v380
      %v466 = vpop.f32.mrf.mxu0
      %v467 = vadd.f32 0.0, %v466
      %v468 = vpop.f32.mrf.mxu0
      %v469 = vadd.f32 0.0, %v468
      %470 = vdwg.mxu0
      %471 = vmatpush.bf16.msra.mxu0 0
      %472 = vmatpush.bf16.msra.mxu0 0
      %473 = vmatpush.bf16.msra.mxu0 0
      %474 = vmatpush.bf16.msra.mxu0 0
      %475 = vmatpush.bf16.msra.mxu0 %v442
      %476 = vmatpush.bf16.msra.mxu0 %v441
      %477 = vmatpush.bf16.msra.mxu0 %v440
      %478 = vmatpush.bf16.msra.mxu0 %v439
      %479 = vmatmul.bf16.gmra.mxu0 %v455
      %v480 = vpop.f32.mrf.mxu0
      %v481 = vadd.f32 %v467, %v480
      %v482 = vpop.f32.mrf.mxu0
      %v483 = vadd.f32 %v469, %v482
      %484 = vdwg.mxu0
      %485 = vst [vmem:[#allocation1] ss:$4 sm:$0xff] %v313
      %s486 = scalar_lea.vmem [#allocation1], 1
      %487 = vst [vmem:[%s486] ss:$4 sm:$0xff] %v315
      %s488 = scalar_lea.vmem [#allocation1], 2
      %489 = vst [vmem:[%s488] ss:$4 sm:$0xff] %v317
      %s490 = scalar_lea.vmem [#allocation1], 3
      %491 = vst [vmem:[%s490] ss:$4 sm:$0xff] %v319
      %v492 = vld.sshfl [vmem:[#allocation1] sm:$0xff pattern:$0x73625140]
      %v493 = vld.sshfl [vmem:[#allocation1 + $0x8] sm:$0xff pattern:$0x73625140]
      %v519 = vunpack.c.l.b16 %v320
      %v520 = vunpack.c.l.b16 %v321
      %v521 = vunpack.c.l.b16 %v322
      %v522 = vunpack.c.l.b16 %v323
      %v523 = vunpack.c.l.b16 %v324
      %v524 = vunpack.c.l.b16 %v325
      %v525 = vunpack.c.l.b16 %v326
      %v526 = vunpack.c.l.b16 %v327
      %v527 = vunpack.c.l.b16 %v328
      %v528 = vunpack.c.l.b16 %v329
      %v529 = vunpack.c.l.b16 %v330
      %v530 = vunpack.c.l.b16 %v331
      %v531 = vunpack.c.l.b16 %v332
      %v532 = vunpack.c.l.b16 %v333
      %v533 = vunpack.c.l.b16 %v334
      %v534 = vunpack.c.l.b16 %v335
      %v535 = vunpack.c.l.b16 %v336
      %v536 = vunpack.c.l.b16 %v337
      %v537 = vunpack.c.l.b16 %v338
      %v538 = vunpack.c.l.b16 %v339
      %v539 = vunpack.c.l.b16 %v340
      %v540 = vunpack.c.l.b16 %v341
      %v541 = vunpack.c.l.b16 %v342
      %v542 = vunpack.c.l.b16 %v343
      %v543 = vpack.c.b16 %v520, %v519
      %v544 = vpack.c.b16 %v522, %v521
      %v545 = vpack.c.b16 %v524, %v523
      %v546 = vpack.c.b16 %v526, %v525
      %v547 = vpack.c.b16 %v528, %v527
      %v548 = vpack.c.b16 %v530, %v529
      %v549 = vpack.c.b16 %v532, %v531
      %v550 = vpack.c.b16 %v534, %v533
      %v551 = vpack.c.b16 %v536, %v535
      %v552 = vpack.c.b16 %v538, %v537
      %v553 = vpack.c.b16 %v540, %v539
      %v554 = vpack.c.b16 %v542, %v541
      %v567 = vsel %vm289, %v493, 0
      %569 = vmatpush.bf16.msra.mxu0 %v550
      %570 = vmatpush.bf16.msra.mxu0 %v549
      %571 = vmatpush.bf16.msra.mxu0 %v548
      %572 = vmatpush.bf16.msra.mxu0 %v547
      %573 = vmatpush.bf16.msra.mxu0 %v546
      %574 = vmatpush.bf16.msra.mxu0 %v545
      %575 = vmatpush.bf16.msra.mxu0 %v544
      %576 = vmatpush.bf16.msra.mxu0 %v543
      %577 = vmatmul.bf16.gmra.mxu0 %v492
      %v578 = vpop.f32.mrf.mxu0
      %v579 = vadd.f32 %v481, %v578
      %v580 = vpop.f32.mrf.mxu0
      %v581 = vadd.f32 %v483, %v580
      %582 = vdwg.mxu0
      %583 = vmatpush.bf16.msra.mxu0 0
      %584 = vmatpush.bf16.msra.mxu0 0
      %585 = vmatpush.bf16.msra.mxu0 0
      %586 = vmatpush.bf16.msra.mxu0 0
      %587 = vmatpush.bf16.msra.mxu0 %v554
      %588 = vmatpush.bf16.msra.mxu0 %v553
      %589 = vmatpush.bf16.msra.mxu0 %v552
      %590 = vmatpush.bf16.msra.mxu0 %v551
      %591 = vmatmul.bf16.gmra.mxu0 %v567
      %v592 = vpop.f32.mrf.mxu0
      %v593 = vadd.f32 %v579, %v592
      %v594 = vpop.f32.mrf.mxu0
      %v595 = vadd.f32 %v581, %v594
      %596 = vdwg.mxu0
      %s597 = scalar_lea.vmem %s1, 192
      %v598 = vld [vmem:[%s597] sm:$0xf]
      %v599 = vld [vmem:[%s597 + $0x4] sm:$0xf]
      %v600 = vld [vmem:[%s597 + $0x8] sm:$0xf]
      %v601 = vld [vmem:[%s597 + $0xc] sm:$0xf]
      %v602 = vld [vmem:[%s597 + $0x10] sm:$0xf]
      %v603 = vld [vmem:[%s597 + $0x14] sm:$0xf]
      %v604 = vld [vmem:[%s597 + $0x18] sm:$0xf]
      %v605 = vld [vmem:[%s597 + $0x1c] sm:$0xf]
      %v606 = vld [vmem:[%s597 + $0x20] sm:$0xf]
      %v607 = vld [vmem:[%s597 + $0x24] sm:$0xf]
      %v608 = vld [vmem:[%s597 + $0x28] sm:$0xf]
      %v609 = vld [vmem:[%s597 + $0x2c] sm:$0xf]
      %v610 = vld [vmem:[%s597 + $0x30] sm:$0xf]
      %v611 = vld [vmem:[%s597 + $0x34] sm:$0xf]
      %v612 = vld [vmem:[%s597 + $0x38] sm:$0xf]
      %v613 = vld [vmem:[%s597 + $0x3c] sm:$0xf]
      %v614 = vld [vmem:[%s597 + $0x40] sm:$0xf]
      %v615 = vld [vmem:[%s597 + $0x44] sm:$0xf]
      %v616 = vld [vmem:[%s597 + $0x48] sm:$0xf]
      %v617 = vld [vmem:[%s597 + $0x4c] sm:$0xf]
      %v618 = vld [vmem:[%s597 + $0x50] sm:$0xf]
      %v619 = vld [vmem:[%s597 + $0x54] sm:$0xf]
      %v620 = vld [vmem:[%s597 + $0x58] sm:$0xf]
      %v621 = vld [vmem:[%s597 + $0x5c] sm:$0xf]
      %622 = vst [vmem:[#allocation1] ss:$4 sm:$0xff] %v317
      %s623 = scalar_lea.vmem [#allocation1], 1
      %624 = vst [vmem:[%s623] ss:$4 sm:$0xff] %v319
      %s625 = scalar_lea.vmem [#allocation1], 2
      %626 = vst [vmem:[%s625] ss:$4 sm:$0xff] %v347
      %s627 = scalar_lea.vmem [#allocation1], 3
      %628 = vst [vmem:[%s627] ss:$4 sm:$0xff] %v313
      %v629 = vld.sshfl [vmem:[#allocation1] sm:$0xff pattern:$0x73625140]
      %v630 = vld.sshfl [vmem:[#allocation1 + $0x8] sm:$0xff pattern:$0x73625140]
      %v656 = vunpack.c.l.b16 %v598
      %v657 = vunpack.c.l.b16 %v599
      %v658 = vunpack.c.l.b16 %v600
      %v659 = vunpack.c.l.b16 %v601
      %v660 = vunpack.c.l.b16 %v602
      %v661 = vunpack.c.l.b16 %v603
      %v662 = vunpack.c.l.b16 %v604
      %v663 = vunpack.c.l.b16 %v605
      %v664 = vunpack.c.l.b16 %v606
      %v665 = vunpack.c.l.b16 %v607
      %v666 = vunpack.c.l.b16 %v608
      %v667 = vunpack.c.l.b16 %v609
      %v668 = vunpack.c.l.b16 %v610
      %v669 = vunpack.c.l.b16 %v611
      %v670 = vunpack.c.l.b16 %v612
      %v671 = vunpack.c.l.b16 %v613
      %v672 = vunpack.c.l.b16 %v614
      %v673 = vunpack.c.l.b16 %v615
      %v674 = vunpack.c.l.b16 %v616
      %v675 = vunpack.c.l.b16 %v617
      %v676 = vunpack.c.l.b16 %v618
      %v677 = vunpack.c.l.b16 %v619
      %v678 = vunpack.c.l.b16 %v620
      %v679 = vunpack.c.l.b16 %v621
      %v680 = vpack.c.b16 %v657, %v656
      %v681 = vpack.c.b16 %v659, %v658
      %v682 = vpack.c.b16 %v661, %v660
      %v683 = vpack.c.b16 %v663, %v662
      %v684 = vpack.c.b16 %v665, %v664
      %v685 = vpack.c.b16 %v667, %v666
      %v686 = vpack.c.b16 %v669, %v668
      %v687 = vpack.c.b16 %v671, %v670
      %v688 = vpack.c.b16 %v673, %v672
      %v689 = vpack.c.b16 %v675, %v674
      %v690 = vpack.c.b16 %v677, %v676
      %v691 = vpack.c.b16 %v679, %v678
      %v704 = vsel %vm289, %v630, 0
      %706 = vmatpush.bf16.msra.mxu0 %v687
      %707 = vmatpush.bf16.msra.mxu0 %v686
      %708 = vmatpush.bf16.msra.mxu0 %v685
      %709 = vmatpush.bf16.msra.mxu0 %v684
      %710 = vmatpush.bf16.msra.mxu0 %v683
      %711 = vmatpush.bf16.msra.mxu0 %v682
      %712 = vmatpush.bf16.msra.mxu0 %v681
      %713 = vmatpush.bf16.msra.mxu0 %v680
      %714 = vmatmul.bf16.gmra.mxu0 %v629
      %v715 = vpop.f32.mrf.mxu0
      %v716 = vadd.f32 0.0, %v715
      %v717 = vpop.f32.mrf.mxu0
      %v718 = vadd.f32 0.0, %v717
      %719 = vdwg.mxu0
      %720 = vmatpush.bf16.msra.mxu0 0
      %721 = vmatpush.bf16.msra.mxu0 0
      %722 = vmatpush.bf16.msra.mxu0 0
      %723 = vmatpush.bf16.msra.mxu0 0
      %724 = vmatpush.bf16.msra.mxu0 %v691
      %725 = vmatpush.bf16.msra.mxu0 %v690
      %726 = vmatpush.bf16.msra.mxu0 %v689
      %727 = vmatpush.bf16.msra.mxu0 %v688
      %728 = vmatmul.bf16.gmra.mxu0 %v704
      %v729 = vpop.f32.mrf.mxu0
      %v730 = vadd.f32 %v716, %v729
      %v731 = vpop.f32.mrf.mxu0
      %v732 = vadd.f32 %v718, %v731
      %733 = vdwg.mxu0
      %v734 = vadd.f32 %v593, %v730
      %v735 = vadd.f32 %v595, %v732
      %v736 = vld [vmem:[%s2] sm:$0x1]
      %v738 = vperm.slane %v736, 0
      %v740 = vadd.f32 %v734, %v738
      %v741 = vadd.f32 %v735, %v738
      %742 = vst [vmem:[%s170] sm:$0xff] %v740
      %743 = vst [vmem:[%s170 + $0x8] sm:$0xff] %v741
      %p744 = scmp.lt.s32.totalorder %s14, 1
      %s745 = scalar_select %p744, %s14, 1
      %s746 = smul.addr %s745, 2
      %s747 = smul.addr %s746, 8
      %s748 = scalar_lea.vmem %s3, %s747
      // Predicated region
      $region33: #{combined_ssd_forward.3} parent=31 // pred_check
        %p749 = pneg %p100
      $region34: #{combined_ssd_forward.3} parent=31 // pred_check_branch
        %751 = sbr.rel (%p749) target = $region36
      $region35: #{combined_ssd_forward.3} parent=31 // pred_region
        _
      $region36: #{combined_ssd_forward.3} parent=31 // pred_fallthru
        _
    $region32: #{combined_ssd_forward.3} parent=5 // pred_fallthru
      _
    %p752 = scmp.le.s32.totalorder 2, %s9
    // Predicated region
    $region37: #{combined_ssd_forward.3} parent=5 // pred_check
      %p753 = pneg %p752
    $region38: #{combined_ssd_forward.3} parent=5 // pred_check_branch
      %755 = sbr.rel (%p753) target = $region40
    $region39: #{combined_ssd_forward.3} parent=5 // pred_region
      %s756 = ssub.s32 %s9, 2
      // Predicated region
      $region41: #{combined_ssd_forward.3} parent=39 // pred_check
        %p757 = pneg %p106
      $region42: #{combined_ssd_forward.3} parent=39 // pred_check_branch
        %759 = sbr.rel (%p757) target = $region44
      $region43: #{combined_ssd_forward.3} parent=39 // pred_region
        %p760 = scmp.lt.s32.totalorder %s15, 1
        %s761 = scalar_select %p760, %s15, 1
        %s762 = smul.addr %s761, 2
        %s763 = smul.addr %s762, 8
        %s764 = scalar_lea.vmem %s3, %s763
      $region44: #{combined_ssd_forward.3} parent=39 // pred_fallthru
        _
    $region40: #{combined_ssd_forward.3} parent=5 // pred_fallthru
      _
  $region6: #{combined_ssd_forward.3} parent=0 // loop_footer
    %s13 = sadd.s32 1, %s9
  $region7: #{combined_ssd_forward.3} parent=0 // loop_footer_branch
    %8 = sbr.rel target = $region3
  $region8: #{combined_ssd_forward.3} parent=0 // loop_exit
    _

</llo_original>
